<compile_context>
chip_gen: v6e
topology: v6e:2x2x1
jax: 0.10.0
libtpu: 0.0.40
codegen_flags: <defaults>
</compile_context>

<pallas_src>
import numpy as np
import jax
import jax.numpy as jnp
from jax import lax
from jax.experimental import pallas as pl
from jax.experimental.pallas import tpu as pltpu

HIDDEN = 20
CIN, H, W = 4, 8, 8                 # Othello: 4 input planes, 8x8 board
BOARD = H * W                       # 64 cells per board
C1 = 2 * HIDDEN                     # 40: concat width after layer 1 / layer 2


def _tap_list():
    """17 fused conv taps: shared centre + 8 dil=1 taps + 8 dil=2 taps."""
    taps = [(0, 0, "both")]
    for dil, branch in ((1, "a"), (2, "b")):
        for ky in range(3):
            for kx in range(3):
                if ky == 1 and kx == 1:
                    continue
                taps.append(((ky - 1) * dil, (kx - 1) * dil, branch))
    return taps


TAPS = _tap_list()
NTAP = len(TAPS)                    # 17
CP1 = 8                             # per-tap rows in layer-1 slab (4 real + 4 zero pad)
CP2 = 48                            # per-tap rows in layer-2 slab (40 real + const-1 + pad)
K1 = CP1 * (NTAP + 1)               # 144 (last 8-row block is the ones/bias block)
K2 = CP2 * NTAP                     # 816
H1ROWS = 48                         # layer-1 output rows (40 real + const-1 + 7 zero)
H2ROWS = 41                         # layer-2 output rows (40 real + const-1)
MAX_LANES = 2048                    # keeps the per-step slabs well inside v7x's 64 MiB VMEM


# ----------------------------------------------------------------------------
# Kernel
# ----------------------------------------------------------------------------
def _make_kernel(lanes):
    # Static lane-roll amounts for the 17 taps (mod the per-block lane width).
    shifts = [(-(dy * W + dx)) % lanes for dy, dx, _ in TAPS]

    def kernel(xx_ref, m_ref, wf1_ref, wf2_ref, w3b_ref, out_ref, p1_ref, p2_ref):
        # ---- layer 1: fused conv1 / conv1_s2 + ReLU (one MXU matmul) -------
        xx = xx_ref[...]                                        # (8, lanes) f32
        for t, s in enumerate(shifts):
            v = xx if s == 0 else pltpu.roll(xx, shift=s, axis=1)
            blk = v if t == 0 else v * m_ref[t]                 # centre tap mask == 1
            p1_ref[CP1 * t:CP1 * (t + 1), :] = blk              # aligned (8, lanes) store
        p1_ref[CP1 * NTAP:CP1 * (NTAP + 1), :] = jnp.ones((CP1, lanes), jnp.float32)
        h1 = jnp.maximum(
            jnp.dot(wf1_ref[...], p1_ref[...].astype(jnp.bfloat16),
                    preferred_element_type=jnp.float32),
            0.0)                                                # (48, lanes); row 40 == 1

        # ---- layer 2: fused conv2 / conv2_s2 + ReLU (one MXU matmul) -------
        for t, s in enumerate(shifts):
            v = h1 if s == 0 else pltpu.roll(h1, shift=s, axis=1)
            blk = v if t == 0 else v * m_ref[t]
            # 48-row bf16 store at a 16-aligned offset -> fully tile-aligned.
            p2_ref[CP2 * t:CP2 * (t + 1), :] = blk.astype(jnp.bfloat16)
        h2 = jnp.maximum(
            jnp.dot(wf2_ref[...], p2_ref[...],
                    preferred_element_type=jnp.float32),
            0.0)                                                # (41, lanes); row 40 == 1

        # ---- layer 3: 1x1 conv + tanh; bias folded as column 40 of w3b -----
        out_ref[...] = jnp.tanh(
            jnp.dot(w3b_ref[...], h2.astype(jnp.bfloat16),
                    preferred_element_type=jnp.float32))        # lane-dense (1, lanes)

    return kernel


# ----------------------------------------------------------------------------
# Host-side constants / parameter packing
# ----------------------------------------------------------------------------
def _build_masks(lanes):
    """(NTAP, 1, lanes) f32 validity masks; column = b*64 + y*8 + x."""
    col = np.arange(lanes)
    yy = (col // W) % H
    xx = col % W
    m = np.zeros((NTAP, 1, lanes), np.float32)
    for t, (dy, dx, _) in enumerate(TAPS):
        ok = (yy + dy >= 0) & (yy + dy < H) & (xx + dx >= 0) & (xx + dx < W)
        m[t, 0] = ok.astype(np.float32)
    return jnp.asarray(m)


def init_params(key):
    """PyTorch-like uniform(-1/sqrt(fan_in), +1/sqrt(fan_in)) init, HWIO weights."""
    def conv_init(k, kh, kw, cin, cout):
        k1, k2 = jax.random.split(k)
        bound = 1.0 / np.sqrt(cin * kh * kw)
        w = jax.random.uniform(k1, (kh, kw, cin, cout), jnp.float32, -bound, bound)
        b = jax.random.uniform(k2, (cout,), jnp.float32, -bound, bound)
        return w, b

    keys = jax.random.split(key, 5)
    w1, b1 = conv_init(keys[0], 3, 3, CIN, HIDDEN)
    w1s2, b1s2 = conv_init(keys[1], 3, 3, CIN, HIDDEN)
    w2, b2 = conv_init(keys[2], 3, 3, C1, HIDDEN)
    w2s2, b2s2 = conv_init(keys[3], 3, 3, C1, HIDDEN)
    w3, b3 = conv_init(keys[4], 1, 1, C1, 1)
    return (w1, b1, w1s2, b1s2, w2, b2, w2s2, b2s2, w3, b3)


def _kidx(dy, dx, dil):
    return dy // dil + 1, dx // dil + 1


def pack_params(params):
    """Pack into 3 bf16 slabs: block-diagonal fused weights + folded biases."""
    (w1, b1, w1s2, b1s2, w2, b2, w2s2, b2s2, w3, b3) = map(np.asarray, params)

    # wf1: (48, 144). rows 0..19 conv1, 20..39 conv1_s2, row 40 = const-1 generator.
    wf1 = np.zeros((H1ROWS, K1), np.float32)
    for t, (dy, dx, br) in enumerate(TAPS):
        for c in range(CIN):
            col = CP1 * t + c
            if br in ("a", "both"):
                ky, kx = _kidx(dy, dx, 1)
                wf1[0:HIDDEN, col] = w1[ky, kx, c, :]
            if br in ("b", "both"):
                ky, kx = _kidx(dy, dx, 2)
                wf1[HIDDEN:C1, col] = w1s2[ky, kx, c, :]
    bias1 = CP1 * NTAP                       # first row of the ones block
    wf1[0:HIDDEN, bias1] = b1
    wf1[HIDDEN:C1, bias1] = b1s2
    wf1[C1, bias1] = 1.0                     # h1 row 40 == 1 (carries layer-2 bias)

    # wf2: (41, 816). rows 0..19 conv2, 20..39 conv2_s2, row 40 = const-1 generator.
    wf2 = np.zeros((H2ROWS, K2), np.float32)
    for t, (dy, dx, br) in enumerate(TAPS):
        cols = slice(CP2 * t, CP2 * t + C1)
        if br in ("a", "both"):
            ky, kx = _kidx(dy, dx, 1)
            wf2[0:HIDDEN, cols] = w2[ky, kx, :, :].T
        if br in ("b", "both"):
            ky, kx = _kidx(dy, dx, 2)
            wf2[HIDDEN:C1, cols] = w2s2[ky, kx, :, :].T
    bias2 = C1                               # tap-0 copy of h1's const-1 row
    wf2[0:HIDDEN, bias2] = b2
    wf2[HIDDEN:C1, bias2] = b2s2
    wf2[C1, bias2] = 1.0                     # h2 row 40 == 1 (carries layer-3 bias)

    # w3b: (1, 41) = [w3 | b3]
    w3b = np.concatenate([w3.reshape(1, C1), b3.reshape(1, 1)], axis=1)

    return (jnp.asarray(wf1, jnp.bfloat16),
            jnp.asarray(wf2, jnp.bfloat16),
            jnp.asarray(w3b, jnp.bfloat16))


# ----------------------------------------------------------------------------
# Wrapper
# ----------------------------------------------------------------------------
def _pick_lanes(n):
    """Largest board-aligned lane block <= MAX_LANES that tiles n (n = B*64)."""
    if n <= MAX_LANES:
        return n
    lanes = MAX_LANES
    while lanes >= 128:
        if n % lanes == 0:
            return lanes
        lanes //= 2
    return n   # rare fallback: single full-width block


def othello_forward(x_nchw, packed):
    wf1, wf2, w3b = packed
    bsz = x_nchw.shape[0]
    n = bsz * BOARD
    lanes = _pick_lanes(n)
    grid = (n // lanes,)

    # channels-major layout: column = b*64 + y*8 + x; channels padded 4 -> 8 so
    # every layer-1 slab store is an aligned (8, lanes) store.
    xcm = jnp.transpose(x_nchw.astype(jnp.float32), (1, 0, 2, 3)).reshape(CIN, n)
    xx = jnp.concatenate([xcm, jnp.zeros((CP1 - CIN, n), jnp.float32)], axis=0)
    masks = _build_masks(lanes)

    const2 = lambda i: (0, 0)
    const3 = lambda i: (0, 0, 0)
    grid_spec = pltpu.PrefetchScalarGridSpec(
        num_scalar_prefetch=0,
        grid=grid,
        in_specs=[
            pl.BlockSpec((CP1, lanes), lambda i: (0, i)),   # x, lane-blocked
            pl.BlockSpec((NTAP, 1, lanes), const3),         # masks, resident
            pl.BlockSpec(wf1.shape, const2),                # weights, resident
            pl.BlockSpec(wf2.shape, const2),
            pl.BlockSpec(w3b.shape, const2),
        ],
        out_specs=pl.BlockSpec((1, lanes), lambda i: (0, i)),
        scratch_shapes=[pltpu.VMEM((K1, lanes), jnp.float32),
                        pltpu.VMEM((K2, lanes), jnp.bfloat16)],
    )
    # TODO(synk): on v7x with large batches, "parallel" lets the second
    # TensorCore share lane blocks; at toy sizes the grid has a single step.
    sem = ("parallel",) if grid[0] > 1 else ("arbitrary",)
    y = pl.pallas_call(
        _make_kernel(lanes),
        out_shape=jax.ShapeDtypeStruct((1, n), jnp.float32),
        grid_spec=grid_spec,
        compiler_params=pltpu.CompilerParams(dimension_semantics=sem),
    )(xx, masks, wf1, wf2, w3b)
    # (1, n) -> (B, H, W); matches PyTorch's rearrange(x, 'b 1 w h -> b w h')
    # which just drops the singleton channel dim.
    return y.reshape(bsz, H, W)


# ----------------------------------------------------------------------------
# Pure-JAX reference with matching bf16 quantization points (for verification)
# ----------------------------------------------------------------------------
def reference_forward(x_nchw, params):
    (w1, b1, w1s2, b1s2, w2, b2, w2s2, b2s2, w3, b3) = params
    q = lambda a: a.astype(jnp.bfloat16)

    def conv(x, w, b, dil):
        y = lax.conv_general_dilated(
            q(x), q(w), window_strides=(1, 1),
            padding=((dil, dil), (dil, dil)), rhs_dilation=(dil, dil),
            dimension_numbers=("NHWC", "HWIO", "NHWC"),
            preferred_element_type=jnp.float32)
        return y + q(b).astype(jnp.float32).reshape(1, 1, 1, -1)

    x = jnp.transpose(x_nchw, (0, 2, 3, 1)).astype(jnp.float32)      # NHWC
    x1 = jnp.concatenate([jax.nn.relu(conv(x, w1, b1, 1)),
                          jax.nn.relu(conv(x, w1s2, b1s2, 2))], axis=-1)
    x2 = jnp.concatenate([jax.nn.relu(conv(x1, w2, b2, 1)),
                          jax.nn.relu(conv(x1, w2s2, b2s2, 2))], axis=-1)
    y = lax.dot_general(q(x2).reshape(-1, C1), q(w3).reshape(C1, 1),
                        (((1,), (0,)), ((), ())),
                        preferred_element_type=jnp.float32)
    y = y + q(b3).astype(jnp.float32).reshape(1, 1)
    return jnp.tanh(y).reshape(x_nchw.shape[0], H, W)


if __name__ == "__main__":
    B = 2
    key = jax.random.PRNGKey(0)
    k_x, k_p = jax.random.split(key)
    x = jax.random.normal(k_x, (B, CIN, H, W), jnp.float32)   # NCHW, as in PyTorch
    params = init_params(k_p)
    packed = pack_params(params)

    out = jax.block_until_ready(othello_forward(x, packed))
    ref = jax.block_until_ready(reference_forward(x, params))

    assert out.shape == (B, H, W)
    max_err = float(jnp.max(jnp.abs(out - ref)))
    assert jnp.allclose(out, ref, rtol=5e-3, atol=5e-3), \
        f"mismatch vs reference (max abs err {max_err})"
    print("KERNEL_OK")
</pallas_src>

<mosaic_0001>
module attributes {stable_mosaic.version = 11 : i64} {
  func.func @kernel(%arg0: i32, %arg1: memref<8x128xf32, #tpu.memory_space<vmem>>, %arg2: memref<17x1x128xf32, #tpu.memory_space<vmem>>, %arg3: memref<48x144xbf16, #tpu.memory_space<vmem>>, %arg4: memref<41x816xbf16, #tpu.memory_space<vmem>>, %arg5: memref<1x41xbf16, #tpu.memory_space<vmem>>, %arg6: memref<1x128xf32, #tpu.memory_space<vmem>>, %arg7: memref<144x128xf32, #tpu.memory_space<vmem>>, %arg8: memref<816x128xbf16, #tpu.memory_space<vmem>>) attributes {dimension_semantics = [#tpu.dimension_semantics<arbitrary>], iteration_bounds = array<i64: 1>, scalar_prefetch = 0 : i64, scratch_operands = 2 : i64, tpu.core_type = #tpu.core_type<tc>, window_params = [{transform_indices = @transform_0, window_bounds = array<i64: 8, 128>}, {pipeline_mode = #tpu.pipeline_mode<synchronous>, transform_indices = @transform_1, window_bounds = array<i64: 17, 1, 128>}, {pipeline_mode = #tpu.pipeline_mode<synchronous>, transform_indices = @transform_2, window_bounds = array<i64: 48, 144>}, {pipeline_mode = #tpu.pipeline_mode<synchronous>, transform_indices = @transform_3, window_bounds = array<i64: 41, 816>}, {pipeline_mode = #tpu.pipeline_mode<synchronous>, transform_indices = @transform_4, window_bounds = array<i64: 1, 41>}, {transform_indices = @transform_5, window_bounds = array<i64: 1, 128>}]} {
    %c0 = arith.constant 0 : index
    %c0_0 = arith.constant 0 : index
    %0 = vector.load %arg1[%c0, %c0_0] : memref<8x128xf32, #tpu.memory_space<vmem>>, vector<8x128xf32>
    %c0_1 = arith.constant 0 : index
    %c0_2 = arith.constant 0 : index
    %1 = vector.load %arg7[%c0_1, %c0_2] : memref<144x128xf32, #tpu.memory_space<vmem>>, vector<8x128xf32>
    tpu.vector_store %arg7[%c0_1, %c0_2], %0 {strides = array<i32>} : memref<144x128xf32, #tpu.memory_space<vmem>>, vector<8x128xf32>,
    %c9_i32 = arith.constant 9 : i32
    %2 = tpu.dynamic_rotate %0 by %c9_i32 dim 1 : vector<8x128xf32>, i32 -> vector<8x128xf32>
    %c1 = arith.constant 1 : index
    %c0_3 = arith.constant 0 : index
    %c0_4 = arith.constant 0 : index
    %3 = vector.load %arg2[%c1, %c0_3, %c0_4] : memref<17x1x128xf32, #tpu.memory_space<vmem>>, vector<1x1x128xf32>
    %4 = vector.shape_cast %3 : vector<1x1x128xf32> to vector<1x128xf32>
    %5 = vector.broadcast %4 : vector<1x128xf32> to vector<8x128xf32>
    %6 = arith.mulf %2, %5 : vector<8x128xf32>
    %c8 = arith.constant 8 : index
    %c0_5 = arith.constant 0 : index
    %7 = vector.load %arg7[%c8, %c0_5] : memref<144x128xf32, #tpu.memory_space<vmem>>, vector<8x128xf32>
    tpu.vector_store %arg7[%c8, %c0_5], %6 {strides = array<i32>} : memref<144x128xf32, #tpu.memory_space<vmem>>, vector<8x128xf32>,
    %c8_i32 = arith.constant 8 : i32
    %8 = tpu.dynamic_rotate %0 by %c8_i32 dim 1 : vector<8x128xf32>, i32 -> vector<8x128xf32>
    %c2 = arith.constant 2 : index
    %c0_6 = arith.constant 0 : index
    %c0_7 = arith.constant 0 : index
    %9 = vector.load %arg2[%c2, %c0_6, %c0_7] : memref<17x1x128xf32, #tpu.memory_space<vmem>>, vector<1x1x128xf32>
    %10 = vector.shape_cast %9 : vector<1x1x128xf32> to vector<1x128xf32>
    %11 = vector.broadcast %10 : vector<1x128xf32> to vector<8x128xf32>
    %12 = arith.mulf %8, %11 : vector<8x128xf32>
    %c16 = arith.constant 16 : index
    %c0_8 = arith.constant 0 : index
    %13 = vector.load %arg7[%c16, %c0_8] : memref<144x128xf32, #tpu.memory_space<vmem>>, vector<8x128xf32>
    tpu.vector_store %arg7[%c16, %c0_8], %12 {strides = array<i32>} : memref<144x128xf32, #tpu.memory_space<vmem>>, vector<8x128xf32>,
    %c7_i32 = arith.constant 7 : i32
    %14 = tpu.dynamic_rotate %0 by %c7_i32 dim 1 : vector<8x128xf32>, i32 -> vector<8x128xf32>
    %c3 = arith.constant 3 : index
    %c0_9 = arith.constant 0 : index
    %c0_10 = arith.constant 0 : index
    %15 = vector.load %arg2[%c3, %c0_9, %c0_10] : memref<17x1x128xf32, #tpu.memory_space<vmem>>, vector<1x1x128xf32>
    %16 = vector.shape_cast %15 : vector<1x1x128xf32> to vector<1x128xf32>
    %17 = vector.broadcast %16 : vector<1x128xf32> to vector<8x128xf32>
    %18 = arith.mulf %14, %17 : vector<8x128xf32>
    %c24 = arith.constant 24 : index
    %c0_11 = arith.constant 0 : index
    %19 = vector.load %arg7[%c24, %c0_11] : memref<144x128xf32, #tpu.memory_space<vmem>>, vector<8x128xf32>
    tpu.vector_store %arg7[%c24, %c0_11], %18 {strides = array<i32>} : memref<144x128xf32, #tpu.memory_space<vmem>>, vector<8x128xf32>,
    %c1_i32 = arith.constant 1 : i32
    %20 = tpu.dynamic_rotate %0 by %c1_i32 dim 1 : vector<8x128xf32>, i32 -> vector<8x128xf32>
    %c4 = arith.constant 4 : index
    %c0_12 = arith.constant 0 : index
    %c0_13 = arith.constant 0 : index
    %21 = vector.load %arg2[%c4, %c0_12, %c0_13] : memref<17x1x128xf32, #tpu.memory_space<vmem>>, vector<1x1x128xf32>
    %22 = vector.shape_cast %21 : vector<1x1x128xf32> to vector<1x128xf32>
    %23 = vector.broadcast %22 : vector<1x128xf32> to vector<8x128xf32>
    %24 = arith.mulf %20, %23 : vector<8x128xf32>
    %c32 = arith.constant 32 : index
    %c0_14 = arith.constant 0 : index
    %25 = vector.load %arg7[%c32, %c0_14] : memref<144x128xf32, #tpu.memory_space<vmem>>, vector<8x128xf32>
    tpu.vector_store %arg7[%c32, %c0_14], %24 {strides = array<i32>} : memref<144x128xf32, #tpu.memory_space<vmem>>, vector<8x128xf32>,
    %c127_i32 = arith.constant 127 : i32
    %26 = tpu.dynamic_rotate %0 by %c127_i32 dim 1 : vector<8x128xf32>, i32 -> vector<8x128xf32>
    %c5 = arith.constant 5 : index
    %c0_15 = arith.constant 0 : index
    %c0_16 = arith.constant 0 : index
    %27 = vector.load %arg2[%c5, %c0_15, %c0_16] : memref<17x1x128xf32, #tpu.memory_space<vmem>>, vector<1x1x128xf32>
    %28 = vector.shape_cast %27 : vector<1x1x128xf32> to vector<1x128xf32>
    %29 = vector.broadcast %28 : vector<1x128xf32> to vector<8x128xf32>
    %30 = arith.mulf %26, %29 : vector<8x128xf32>
    %c40 = arith.constant 40 : index
    %c0_17 = arith.constant 0 : index
    %31 = vector.load %arg7[%c40, %c0_17] : memref<144x128xf32, #tpu.memory_space<vmem>>, vector<8x128xf32>
    tpu.vector_store %arg7[%c40, %c0_17], %30 {strides = array<i32>} : memref<144x128xf32, #tpu.memory_space<vmem>>, vector<8x128xf32>,
    %c121_i32 = arith.constant 121 : i32
    %32 = tpu.dynamic_rotate %0 by %c121_i32 dim 1 : vector<8x128xf32>, i32 -> vector<8x128xf32>
    %c6 = arith.constant 6 : index
    %c0_18 = arith.constant 0 : index
    %c0_19 = arith.constant 0 : index
    %33 = vector.load %arg2[%c6, %c0_18, %c0_19] : memref<17x1x128xf32, #tpu.memory_space<vmem>>, vector<1x1x128xf32>
    %34 = vector.shape_cast %33 : vector<1x1x128xf32> to vector<1x128xf32>
    %35 = vector.broadcast %34 : vector<1x128xf32> to vector<8x128xf32>
    %36 = arith.mulf %32, %35 : vector<8x128xf32>
    %c48 = arith.constant 48 : index
    %c0_20 = arith.constant 0 : index
    %37 = vector.load %arg7[%c48, %c0_20] : memref<144x128xf32, #tpu.memory_space<vmem>>, vector<8x128xf32>
    tpu.vector_store %arg7[%c48, %c0_20], %36 {strides = array<i32>} : memref<144x128xf32, #tpu.memory_space<vmem>>, vector<8x128xf32>,
    %c120_i32 = arith.constant 120 : i32
    %38 = tpu.dynamic_rotate %0 by %c120_i32 dim 1 : vector<8x128xf32>, i32 -> vector<8x128xf32>
    %c7 = arith.constant 7 : index
    %c0_21 = arith.constant 0 : index
    %c0_22 = arith.constant 0 : index
    %39 = vector.load %arg2[%c7, %c0_21, %c0_22] : memref<17x1x128xf32, #tpu.memory_space<vmem>>, vector<1x1x128xf32>
    %40 = vector.shape_cast %39 : vector<1x1x128xf32> to vector<1x128xf32>
    %41 = vector.broadcast %40 : vector<1x128xf32> to vector<8x128xf32>
    %42 = arith.mulf %38, %41 : vector<8x128xf32>
    %c56 = arith.constant 56 : index
    %c0_23 = arith.constant 0 : index
    %43 = vector.load %arg7[%c56, %c0_23] : memref<144x128xf32, #tpu.memory_space<vmem>>, vector<8x128xf32>
    tpu.vector_store %arg7[%c56, %c0_23], %42 {strides = array<i32>} : memref<144x128xf32, #tpu.memory_space<vmem>>, vector<8x128xf32>,
    %c119_i32 = arith.constant 119 : i32
    %44 = tpu.dynamic_rotate %0 by %c119_i32 dim 1 : vector<8x128xf32>, i32 -> vector<8x128xf32>
    %c8_24 = arith.constant 8 : index
    %c0_25 = arith.constant 0 : index
    %c0_26 = arith.constant 0 : index
    %45 = vector.load %arg2[%c8_24, %c0_25, %c0_26] : memref<17x1x128xf32, #tpu.memory_space<vmem>>, vector<1x1x128xf32>
    %46 = vector.shape_cast %45 : vector<1x1x128xf32> to vector<1x128xf32>
    %47 = vector.broadcast %46 : vector<1x128xf32> to vector<8x128xf32>
    %48 = arith.mulf %44, %47 : vector<8x128xf32>
    %c64 = arith.constant 64 : index
    %c0_27 = arith.constant 0 : index
    %49 = vector.load %arg7[%c64, %c0_27] : memref<144x128xf32, #tpu.memory_space<vmem>>, vector<8x128xf32>
    tpu.vector_store %arg7[%c64, %c0_27], %48 {strides = array<i32>} : memref<144x128xf32, #tpu.memory_space<vmem>>, vector<8x128xf32>,
    %c18_i32 = arith.constant 18 : i32
    %50 = tpu.dynamic_rotate %0 by %c18_i32 dim 1 : vector<8x128xf32>, i32 -> vector<8x128xf32>
    %c9 = arith.constant 9 : index
    %c0_28 = arith.constant 0 : index
    %c0_29 = arith.constant 0 : index
    %51 = vector.load %arg2[%c9, %c0_28, %c0_29] : memref<17x1x128xf32, #tpu.memory_space<vmem>>, vector<1x1x128xf32>
    %52 = vector.shape_cast %51 : vector<1x1x128xf32> to vector<1x128xf32>
    %53 = vector.broadcast %52 : vector<1x128xf32> to vector<8x128xf32>
    %54 = arith.mulf %50, %53 : vector<8x128xf32>
    %c72 = arith.constant 72 : index
    %c0_30 = arith.constant 0 : index
    %55 = vector.load %arg7[%c72, %c0_30] : memref<144x128xf32, #tpu.memory_space<vmem>>, vector<8x128xf32>
    tpu.vector_store %arg7[%c72, %c0_30], %54 {strides = array<i32>} : memref<144x128xf32, #tpu.memory_space<vmem>>, vector<8x128xf32>,
    %c16_i32 = arith.constant 16 : i32
    %56 = tpu.dynamic_rotate %0 by %c16_i32 dim 1 : vector<8x128xf32>, i32 -> vector<8x128xf32>
    %c10 = arith.constant 10 : index
    %c0_31 = arith.constant 0 : index
    %c0_32 = arith.constant 0 : index
    %57 = vector.load %arg2[%c10, %c0_31, %c0_32] : memref<17x1x128xf32, #tpu.memory_space<vmem>>, vector<1x1x128xf32>
    %58 = vector.shape_cast %57 : vector<1x1x128xf32> to vector<1x128xf32>
    %59 = vector.broadcast %58 : vector<1x128xf32> to vector<8x128xf32>
    %60 = arith.mulf %56, %59 : vector<8x128xf32>
    %c80 = arith.constant 80 : index
    %c0_33 = arith.constant 0 : index
    %61 = vector.load %arg7[%c80, %c0_33] : memref<144x128xf32, #tpu.memory_space<vmem>>, vector<8x128xf32>
    tpu.vector_store %arg7[%c80, %c0_33], %60 {strides = array<i32>} : memref<144x128xf32, #tpu.memory_space<vmem>>, vector<8x128xf32>,
    %c14_i32 = arith.constant 14 : i32
    %62 = tpu.dynamic_rotate %0 by %c14_i32 dim 1 : vector<8x128xf32>, i32 -> vector<8x128xf32>
    %c11 = arith.constant 11 : index
    %c0_34 = arith.constant 0 : index
    %c0_35 = arith.constant 0 : index
    %63 = vector.load %arg2[%c11, %c0_34, %c0_35] : memref<17x1x128xf32, #tpu.memory_space<vmem>>, vector<1x1x128xf32>
    %64 = vector.shape_cast %63 : vector<1x1x128xf32> to vector<1x128xf32>
    %65 = vector.broadcast %64 : vector<1x128xf32> to vector<8x128xf32>
    %66 = arith.mulf %62, %65 : vector<8x128xf32>
    %c88 = arith.constant 88 : index
    %c0_36 = arith.constant 0 : index
    %67 = vector.load %arg7[%c88, %c0_36] : memref<144x128xf32, #tpu.memory_space<vmem>>, vector<8x128xf32>
    tpu.vector_store %arg7[%c88, %c0_36], %66 {strides = array<i32>} : memref<144x128xf32, #tpu.memory_space<vmem>>, vector<8x128xf32>,
    %c2_i32 = arith.constant 2 : i32
    %68 = tpu.dynamic_rotate %0 by %c2_i32 dim 1 : vector<8x128xf32>, i32 -> vector<8x128xf32>
    %c12 = arith.constant 12 : index
    %c0_37 = arith.constant 0 : index
    %c0_38 = arith.constant 0 : index
    %69 = vector.load %arg2[%c12, %c0_37, %c0_38] : memref<17x1x128xf32, #tpu.memory_space<vmem>>, vector<1x1x128xf32>
    %70 = vector.shape_cast %69 : vector<1x1x128xf32> to vector<1x128xf32>
    %71 = vector.broadcast %70 : vector<1x128xf32> to vector<8x128xf32>
    %72 = arith.mulf %68, %71 : vector<8x128xf32>
    %c96 = arith.constant 96 : index
    %c0_39 = arith.constant 0 : index
    %73 = vector.load %arg7[%c96, %c0_39] : memref<144x128xf32, #tpu.memory_space<vmem>>, vector<8x128xf32>
    tpu.vector_store %arg7[%c96, %c0_39], %72 {strides = array<i32>} : memref<144x128xf32, #tpu.memory_space<vmem>>, vector<8x128xf32>,
    %c126_i32 = arith.constant 126 : i32
    %74 = tpu.dynamic_rotate %0 by %c126_i32 dim 1 : vector<8x128xf32>, i32 -> vector<8x128xf32>
    %c13 = arith.constant 13 : index
    %c0_40 = arith.constant 0 : index
    %c0_41 = arith.constant 0 : index
    %75 = vector.load %arg2[%c13, %c0_40, %c0_41] : memref<17x1x128xf32, #tpu.memory_space<vmem>>, vector<1x1x128xf32>
    %76 = vector.shape_cast %75 : vector<1x1x128xf32> to vector<1x128xf32>
    %77 = vector.broadcast %76 : vector<1x128xf32> to vector<8x128xf32>
    %78 = arith.mulf %74, %77 : vector<8x128xf32>
    %c104 = arith.constant 104 : index
    %c0_42 = arith.constant 0 : index
    %79 = vector.load %arg7[%c104, %c0_42] : memref<144x128xf32, #tpu.memory_space<vmem>>, vector<8x128xf32>
    tpu.vector_store %arg7[%c104, %c0_42], %78 {strides = array<i32>} : memref<144x128xf32, #tpu.memory_space<vmem>>, vector<8x128xf32>,
    %c114_i32 = arith.constant 114 : i32
    %80 = tpu.dynamic_rotate %0 by %c114_i32 dim 1 : vector<8x128xf32>, i32 -> vector<8x128xf32>
    %c14 = arith.constant 14 : index
    %c0_43 = arith.constant 0 : index
    %c0_44 = arith.constant 0 : index
    %81 = vector.load %arg2[%c14, %c0_43, %c0_44] : memref<17x1x128xf32, #tpu.memory_space<vmem>>, vector<1x1x128xf32>
    %82 = vector.shape_cast %81 : vector<1x1x128xf32> to vector<1x128xf32>
    %83 = vector.broadcast %82 : vector<1x128xf32> to vector<8x128xf32>
    %84 = arith.mulf %80, %83 : vector<8x128xf32>
    %c112 = arith.constant 112 : index
    %c0_45 = arith.constant 0 : index
    %85 = vector.load %arg7[%c112, %c0_45] : memref<144x128xf32, #tpu.memory_space<vmem>>, vector<8x128xf32>
    tpu.vector_store %arg7[%c112, %c0_45], %84 {strides = array<i32>} : memref<144x128xf32, #tpu.memory_space<vmem>>, vector<8x128xf32>,
    %c112_i32 = arith.constant 112 : i32
    %86 = tpu.dynamic_rotate %0 by %c112_i32 dim 1 : vector<8x128xf32>, i32 -> vector<8x128xf32>
    %c15 = arith.constant 15 : index
    %c0_46 = arith.constant 0 : index
    %c0_47 = arith.constant 0 : index
    %87 = vector.load %arg2[%c15, %c0_46, %c0_47] : memref<17x1x128xf32, #tpu.memory_space<vmem>>, vector<1x1x128xf32>
    %88 = vector.shape_cast %87 : vector<1x1x128xf32> to vector<1x128xf32>
    %89 = vector.broadcast %88 : vector<1x128xf32> to vector<8x128xf32>
    %90 = arith.mulf %86, %89 : vector<8x128xf32>
    %c120 = arith.constant 120 : index
    %c0_48 = arith.constant 0 : index
    %91 = vector.load %arg7[%c120, %c0_48] : memref<144x128xf32, #tpu.memory_space<vmem>>, vector<8x128xf32>
    tpu.vector_store %arg7[%c120, %c0_48], %90 {strides = array<i32>} : memref<144x128xf32, #tpu.memory_space<vmem>>, vector<8x128xf32>,
    %c110_i32 = arith.constant 110 : i32
    %92 = tpu.dynamic_rotate %0 by %c110_i32 dim 1 : vector<8x128xf32>, i32 -> vector<8x128xf32>
    %c16_49 = arith.constant 16 : index
    %c0_50 = arith.constant 0 : index
    %c0_51 = arith.constant 0 : index
    %93 = vector.load %arg2[%c16_49, %c0_50, %c0_51] : memref<17x1x128xf32, #tpu.memory_space<vmem>>, vector<1x1x128xf32>
    %94 = vector.shape_cast %93 : vector<1x1x128xf32> to vector<1x128xf32>
    %95 = vector.broadcast %94 : vector<1x128xf32> to vector<8x128xf32>
    %96 = arith.mulf %92, %95 : vector<8x128xf32>
    %c128 = arith.constant 128 : index
    %c0_52 = arith.constant 0 : index
    %97 = vector.load %arg7[%c128, %c0_52] : memref<144x128xf32, #tpu.memory_space<vmem>>, vector<8x128xf32>
    tpu.vector_store %arg7[%c128, %c0_52], %96 {strides = array<i32>} : memref<144x128xf32, #tpu.memory_space<vmem>>, vector<8x128xf32>,
    %cst = arith.constant 1.000000e+00 : f32
    %98 = vector.broadcast %cst : f32 to vector<8x128xf32>
    %c136 = arith.constant 136 : index
    %c0_53 = arith.constant 0 : index
    %99 = vector.load %arg7[%c136, %c0_53] : memref<144x128xf32, #tpu.memory_space<vmem>>, vector<8x128xf32>
    tpu.vector_store %arg7[%c136, %c0_53], %98 {strides = array<i32>} : memref<144x128xf32, #tpu.memory_space<vmem>>, vector<8x128xf32>,
    %c0_54 = arith.constant 0 : index
    %c0_55 = arith.constant 0 : index
    %100 = vector.load %arg3[%c0_54, %c0_55] : memref<48x144xbf16, #tpu.memory_space<vmem>>, vector<48x144xbf16>
    %c0_56 = arith.constant 0 : index
    %c0_57 = arith.constant 0 : index
    %101 = vector.load %arg7[%c0_56, %c0_57] : memref<144x128xf32, #tpu.memory_space<vmem>>, vector<144x128xf32>
    %102 = arith.truncf %101 : vector<144x128xf32> to vector<144x128xbf16>
    %cst_58 = arith.constant dense<0.000000e+00> : vector<48x128xf32>
    %103 = tpu.matmul %100, %102, %cst_58 {dimension_numbers = #tpu.dot_dimension_numbers<[1], [0], [0], [1], [0, 0, 1, 1], [], []>} : vector<48x144xbf16>, vector<144x128xbf16>, vector<48x128xf32> -> vector<48x128xf32>
    %cst_59 = arith.constant 0.000000e+00 : f32
    %104 = vector.broadcast %cst_59 : f32 to vector<48x128xf32>
    %105 = arith.maximumf %103, %104 : vector<48x128xf32>
    %106 = arith.truncf %105 : vector<48x128xf32> to vector<48x128xbf16>
    %c0_60 = arith.constant 0 : index
    %c0_61 = arith.constant 0 : index
    %107 = vector.load %arg8[%c0_60, %c0_61] : memref<816x128xbf16, #tpu.memory_space<vmem>>, vector<48x128xbf16>
    tpu.vector_store %arg8[%c0_60, %c0_61], %106 {strides = array<i32>} : memref<816x128xbf16, #tpu.memory_space<vmem>>, vector<48x128xbf16>,
    %c9_i32_62 = arith.constant 9 : i32
    %108 = tpu.dynamic_rotate %105 by %c9_i32_62 dim 1 : vector<48x128xf32>, i32 -> vector<48x128xf32>
    %c1_63 = arith.constant 1 : index
    %c0_64 = arith.constant 0 : index
    %c0_65 = arith.constant 0 : index
    %109 = vector.load %arg2[%c1_63, %c0_64, %c0_65] : memref<17x1x128xf32, #tpu.memory_space<vmem>>, vector<1x1x128xf32>
    %110 = vector.shape_cast %109 : vector<1x1x128xf32> to vector<1x128xf32>
    %111 = vector.broadcast %110 : vector<1x128xf32> to vector<48x128xf32>
    %112 = arith.mulf %108, %111 : vector<48x128xf32>
    %113 = arith.truncf %112 : vector<48x128xf32> to vector<48x128xbf16>
    %c48_66 = arith.constant 48 : index
    %c0_67 = arith.constant 0 : index
    %114 = vector.load %arg8[%c48_66, %c0_67] : memref<816x128xbf16, #tpu.memory_space<vmem>>, vector<48x128xbf16>
    tpu.vector_store %arg8[%c48_66, %c0_67], %113 {strides = array<i32>} : memref<816x128xbf16, #tpu.memory_space<vmem>>, vector<48x128xbf16>,
    %c8_i32_68 = arith.constant 8 : i32
    %115 = tpu.dynamic_rotate %105 by %c8_i32_68 dim 1 : vector<48x128xf32>, i32 -> vector<48x128xf32>
    %c2_69 = arith.constant 2 : index
    %c0_70 = arith.constant 0 : index
    %c0_71 = arith.constant 0 : index
    %116 = vector.load %arg2[%c2_69, %c0_70, %c0_71] : memref<17x1x128xf32, #tpu.memory_space<vmem>>, vector<1x1x128xf32>
    %117 = vector.shape_cast %116 : vector<1x1x128xf32> to vector<1x128xf32>
    %118 = vector.broadcast %117 : vector<1x128xf32> to vector<48x128xf32>
    %119 = arith.mulf %115, %118 : vector<48x128xf32>
    %120 = arith.truncf %119 : vector<48x128xf32> to vector<48x128xbf16>
    %c96_72 = arith.constant 96 : index
    %c0_73 = arith.constant 0 : index
    %121 = vector.load %arg8[%c96_72, %c0_73] : memref<816x128xbf16, #tpu.memory_space<vmem>>, vector<48x128xbf16>
    tpu.vector_store %arg8[%c96_72, %c0_73], %120 {strides = array<i32>} : memref<816x128xbf16, #tpu.memory_space<vmem>>, vector<48x128xbf16>,
    %c7_i32_74 = arith.constant 7 : i32
    %122 = tpu.dynamic_rotate %105 by %c7_i32_74 dim 1 : vector<48x128xf32>, i32 -> vector<48x128xf32>
    %c3_75 = arith.constant 3 : index
    %c0_76 = arith.constant 0 : index
    %c0_77 = arith.constant 0 : index
    %123 = vector.load %arg2[%c3_75, %c0_76, %c0_77] : memref<17x1x128xf32, #tpu.memory_space<vmem>>, vector<1x1x128xf32>
    %124 = vector.shape_cast %123 : vector<1x1x128xf32> to vector<1x128xf32>
    %125 = vector.broadcast %124 : vector<1x128xf32> to vector<48x128xf32>
    %126 = arith.mulf %122, %125 : vector<48x128xf32>
    %127 = arith.truncf %126 : vector<48x128xf32> to vector<48x128xbf16>
    %c144 = arith.constant 144 : index
    %c0_78 = arith.constant 0 : index
    %128 = vector.load %arg8[%c144, %c0_78] : memref<816x128xbf16, #tpu.memory_space<vmem>>, vector<48x128xbf16>
    tpu.vector_store %arg8[%c144, %c0_78], %127 {strides = array<i32>} : memref<816x128xbf16, #tpu.memory_space<vmem>>, vector<48x128xbf16>,
    %c1_i32_79 = arith.constant 1 : i32
    %129 = tpu.dynamic_rotate %105 by %c1_i32_79 dim 1 : vector<48x128xf32>, i32 -> vector<48x128xf32>
    %c4_80 = arith.constant 4 : index
    %c0_81 = arith.constant 0 : index
    %c0_82 = arith.constant 0 : index
    %130 = vector.load %arg2[%c4_80, %c0_81, %c0_82] : memref<17x1x128xf32, #tpu.memory_space<vmem>>, vector<1x1x128xf32>
    %131 = vector.shape_cast %130 : vector<1x1x128xf32> to vector<1x128xf32>
    %132 = vector.broadcast %131 : vector<1x128xf32> to vector<48x128xf32>
    %133 = arith.mulf %129, %132 : vector<48x128xf32>
    %134 = arith.truncf %133 : vector<48x128xf32> to vector<48x128xbf16>
    %c192 = arith.constant 192 : index
    %c0_83 = arith.constant 0 : index
    %135 = vector.load %arg8[%c192, %c0_83] : memref<816x128xbf16, #tpu.memory_space<vmem>>, vector<48x128xbf16>
    tpu.vector_store %arg8[%c192, %c0_83], %134 {strides = array<i32>} : memref<816x128xbf16, #tpu.memory_space<vmem>>, vector<48x128xbf16>,
    %c127_i32_84 = arith.constant 127 : i32
    %136 = tpu.dynamic_rotate %105 by %c127_i32_84 dim 1 : vector<48x128xf32>, i32 -> vector<48x128xf32>
    %c5_85 = arith.constant 5 : index
    %c0_86 = arith.constant 0 : index
    %c0_87 = arith.constant 0 : index
    %137 = vector.load %arg2[%c5_85, %c0_86, %c0_87] : memref<17x1x128xf32, #tpu.memory_space<vmem>>, vector<1x1x128xf32>
    %138 = vector.shape_cast %137 : vector<1x1x128xf32> to vector<1x128xf32>
    %139 = vector.broadcast %138 : vector<1x128xf32> to vector<48x128xf32>
    %140 = arith.mulf %136, %139 : vector<48x128xf32>
    %141 = arith.truncf %140 : vector<48x128xf32> to vector<48x128xbf16>
    %c240 = arith.constant 240 : index
    %c0_88 = arith.constant 0 : index
    %142 = vector.load %arg8[%c240, %c0_88] : memref<816x128xbf16, #tpu.memory_space<vmem>>, vector<48x128xbf16>
    tpu.vector_store %arg8[%c240, %c0_88], %141 {strides = array<i32>} : memref<816x128xbf16, #tpu.memory_space<vmem>>, vector<48x128xbf16>,
    %c121_i32_89 = arith.constant 121 : i32
    %143 = tpu.dynamic_rotate %105 by %c121_i32_89 dim 1 : vector<48x128xf32>, i32 -> vector<48x128xf32>
    %c6_90 = arith.constant 6 : index
    %c0_91 = arith.constant 0 : index
    %c0_92 = arith.constant 0 : index
    %144 = vector.load %arg2[%c6_90, %c0_91, %c0_92] : memref<17x1x128xf32, #tpu.memory_space<vmem>>, vector<1x1x128xf32>
    %145 = vector.shape_cast %144 : vector<1x1x128xf32> to vector<1x128xf32>
    %146 = vector.broadcast %145 : vector<1x128xf32> to vector<48x128xf32>
    %147 = arith.mulf %143, %146 : vector<48x128xf32>
    %148 = arith.truncf %147 : vector<48x128xf32> to vector<48x128xbf16>
    %c288 = arith.constant 288 : index
    %c0_93 = arith.constant 0 : index
    %149 = vector.load %arg8[%c288, %c0_93] : memref<816x128xbf16, #tpu.memory_space<vmem>>, vector<48x128xbf16>
    tpu.vector_store %arg8[%c288, %c0_93], %148 {strides = array<i32>} : memref<816x128xbf16, #tpu.memory_space<vmem>>, vector<48x128xbf16>,
    %c120_i32_94 = arith.constant 120 : i32
    %150 = tpu.dynamic_rotate %105 by %c120_i32_94 dim 1 : vector<48x128xf32>, i32 -> vector<48x128xf32>
    %c7_95 = arith.constant 7 : index
    %c0_96 = arith.constant 0 : index
    %c0_97 = arith.constant 0 : index
    %151 = vector.load %arg2[%c7_95, %c0_96, %c0_97] : memref<17x1x128xf32, #tpu.memory_space<vmem>>, vector<1x1x128xf32>
    %152 = vector.shape_cast %151 : vector<1x1x128xf32> to vector<1x128xf32>
    %153 = vector.broadcast %152 : vector<1x128xf32> to vector<48x128xf32>
    %154 = arith.mulf %150, %153 : vector<48x128xf32>
    %155 = arith.truncf %154 : vector<48x128xf32> to vector<48x128xbf16>
    %c336 = arith.constant 336 : index
    %c0_98 = arith.constant 0 : index
    %156 = vector.load %arg8[%c336, %c0_98] : memref<816x128xbf16, #tpu.memory_space<vmem>>, vector<48x128xbf16>
    tpu.vector_store %arg8[%c336, %c0_98], %155 {strides = array<i32>} : memref<816x128xbf16, #tpu.memory_space<vmem>>, vector<48x128xbf16>,
    %c119_i32_99 = arith.constant 119 : i32
    %157 = tpu.dynamic_rotate %105 by %c119_i32_99 dim 1 : vector<48x128xf32>, i32 -> vector<48x128xf32>
    %c8_100 = arith.constant 8 : index
    %c0_101 = arith.constant 0 : index
    %c0_102 = arith.constant 0 : index
    %158 = vector.load %arg2[%c8_100, %c0_101, %c0_102] : memref<17x1x128xf32, #tpu.memory_space<vmem>>, vector<1x1x128xf32>
    %159 = vector.shape_cast %158 : vector<1x1x128xf32> to vector<1x128xf32>
    %160 = vector.broadcast %159 : vector<1x128xf32> to vector<48x128xf32>
    %161 = arith.mulf %157, %160 : vector<48x128xf32>
    %162 = arith.truncf %161 : vector<48x128xf32> to vector<48x128xbf16>
    %c384 = arith.constant 384 : index
    %c0_103 = arith.constant 0 : index
    %163 = vector.load %arg8[%c384, %c0_103] : memref<816x128xbf16, #tpu.memory_space<vmem>>, vector<48x128xbf16>
    tpu.vector_store %arg8[%c384, %c0_103], %162 {strides = array<i32>} : memref<816x128xbf16, #tpu.memory_space<vmem>>, vector<48x128xbf16>,
    %c18_i32_104 = arith.constant 18 : i32
    %164 = tpu.dynamic_rotate %105 by %c18_i32_104 dim 1 : vector<48x128xf32>, i32 -> vector<48x128xf32>
    %c9_105 = arith.constant 9 : index
    %c0_106 = arith.constant 0 : index
    %c0_107 = arith.constant 0 : index
    %165 = vector.load %arg2[%c9_105, %c0_106, %c0_107] : memref<17x1x128xf32, #tpu.memory_space<vmem>>, vector<1x1x128xf32>
    %166 = vector.shape_cast %165 : vector<1x1x128xf32> to vector<1x128xf32>
    %167 = vector.broadcast %166 : vector<1x128xf32> to vector<48x128xf32>
    %168 = arith.mulf %164, %167 : vector<48x128xf32>
    %169 = arith.truncf %168 : vector<48x128xf32> to vector<48x128xbf16>
    %c432 = arith.constant 432 : index
    %c0_108 = arith.constant 0 : index
    %170 = vector.load %arg8[%c432, %c0_108] : memref<816x128xbf16, #tpu.memory_space<vmem>>, vector<48x128xbf16>
    tpu.vector_store %arg8[%c432, %c0_108], %169 {strides = array<i32>} : memref<816x128xbf16, #tpu.memory_space<vmem>>, vector<48x128xbf16>,
    %c16_i32_109 = arith.constant 16 : i32
    %171 = tpu.dynamic_rotate %105 by %c16_i32_109 dim 1 : vector<48x128xf32>, i32 -> vector<48x128xf32>
    %c10_110 = arith.constant 10 : index
    %c0_111 = arith.constant 0 : index
    %c0_112 = arith.constant 0 : index
    %172 = vector.load %arg2[%c10_110, %c0_111, %c0_112] : memref<17x1x128xf32, #tpu.memory_space<vmem>>, vector<1x1x128xf32>
    %173 = vector.shape_cast %172 : vector<1x1x128xf32> to vector<1x128xf32>
    %174 = vector.broadcast %173 : vector<1x128xf32> to vector<48x128xf32>
    %175 = arith.mulf %171, %174 : vector<48x128xf32>
    %176 = arith.truncf %175 : vector<48x128xf32> to vector<48x128xbf16>
    %c480 = arith.constant 480 : index
    %c0_113 = arith.constant 0 : index
    %177 = vector.load %arg8[%c480, %c0_113] : memref<816x128xbf16, #tpu.memory_space<vmem>>, vector<48x128xbf16>
    tpu.vector_store %arg8[%c480, %c0_113], %176 {strides = array<i32>} : memref<816x128xbf16, #tpu.memory_space<vmem>>, vector<48x128xbf16>,
    %c14_i32_114 = arith.constant 14 : i32
    %178 = tpu.dynamic_rotate %105 by %c14_i32_114 dim 1 : vector<48x128xf32>, i32 -> vector<48x128xf32>
    %c11_115 = arith.constant 11 : index
    %c0_116 = arith.constant 0 : index
    %c0_117 = arith.constant 0 : index
    %179 = vector.load %arg2[%c11_115, %c0_116, %c0_117] : memref<17x1x128xf32, #tpu.memory_space<vmem>>, vector<1x1x128xf32>
    %180 = vector.shape_cast %179 : vector<1x1x128xf32> to vector<1x128xf32>
    %181 = vector.broadcast %180 : vector<1x128xf32> to vector<48x128xf32>
    %182 = arith.mulf %178, %181 : vector<48x128xf32>
    %183 = arith.truncf %182 : vector<48x128xf32> to vector<48x128xbf16>
    %c528 = arith.constant 528 : index
    %c0_118 = arith.constant 0 : index
    %184 = vector.load %arg8[%c528, %c0_118] : memref<816x128xbf16, #tpu.memory_space<vmem>>, vector<48x128xbf16>
    tpu.vector_store %arg8[%c528, %c0_118], %183 {strides = array<i32>} : memref<816x128xbf16, #tpu.memory_space<vmem>>, vector<48x128xbf16>,
    %c2_i32_119 = arith.constant 2 : i32
    %185 = tpu.dynamic_rotate %105 by %c2_i32_119 dim 1 : vector<48x128xf32>, i32 -> vector<48x128xf32>
    %c12_120 = arith.constant 12 : index
    %c0_121 = arith.constant 0 : index
    %c0_122 = arith.constant 0 : index
    %186 = vector.load %arg2[%c12_120, %c0_121, %c0_122] : memref<17x1x128xf32, #tpu.memory_space<vmem>>, vector<1x1x128xf32>
    %187 = vector.shape_cast %186 : vector<1x1x128xf32> to vector<1x128xf32>
    %188 = vector.broadcast %187 : vector<1x128xf32> to vector<48x128xf32>
    %189 = arith.mulf %185, %188 : vector<48x128xf32>
    %190 = arith.truncf %189 : vector<48x128xf32> to vector<48x128xbf16>
    %c576 = arith.constant 576 : index
    %c0_123 = arith.constant 0 : index
    %191 = vector.load %arg8[%c576, %c0_123] : memref<816x128xbf16, #tpu.memory_space<vmem>>, vector<48x128xbf16>
    tpu.vector_store %arg8[%c576, %c0_123], %190 {strides = array<i32>} : memref<816x128xbf16, #tpu.memory_space<vmem>>, vector<48x128xbf16>,
    %c126_i32_124 = arith.constant 126 : i32
    %192 = tpu.dynamic_rotate %105 by %c126_i32_124 dim 1 : vector<48x128xf32>, i32 -> vector<48x128xf32>
    %c13_125 = arith.constant 13 : index
    %c0_126 = arith.constant 0 : index
    %c0_127 = arith.constant 0 : index
    %193 = vector.load %arg2[%c13_125, %c0_126, %c0_127] : memref<17x1x128xf32, #tpu.memory_space<vmem>>, vector<1x1x128xf32>
    %194 = vector.shape_cast %193 : vector<1x1x128xf32> to vector<1x128xf32>
    %195 = vector.broadcast %194 : vector<1x128xf32> to vector<48x128xf32>
    %196 = arith.mulf %192, %195 : vector<48x128xf32>
    %197 = arith.truncf %196 : vector<48x128xf32> to vector<48x128xbf16>
    %c624 = arith.constant 624 : index
    %c0_128 = arith.constant 0 : index
    %198 = vector.load %arg8[%c624, %c0_128] : memref<816x128xbf16, #tpu.memory_space<vmem>>, vector<48x128xbf16>
    tpu.vector_store %arg8[%c624, %c0_128], %197 {strides = array<i32>} : memref<816x128xbf16, #tpu.memory_space<vmem>>, vector<48x128xbf16>,
    %c114_i32_129 = arith.constant 114 : i32
    %199 = tpu.dynamic_rotate %105 by %c114_i32_129 dim 1 : vector<48x128xf32>, i32 -> vector<48x128xf32>
    %c14_130 = arith.constant 14 : index
    %c0_131 = arith.constant 0 : index
    %c0_132 = arith.constant 0 : index
    %200 = vector.load %arg2[%c14_130, %c0_131, %c0_132] : memref<17x1x128xf32, #tpu.memory_space<vmem>>, vector<1x1x128xf32>
    %201 = vector.shape_cast %200 : vector<1x1x128xf32> to vector<1x128xf32>
    %202 = vector.broadcast %201 : vector<1x128xf32> to vector<48x128xf32>
    %203 = arith.mulf %199, %202 : vector<48x128xf32>
    %204 = arith.truncf %203 : vector<48x128xf32> to vector<48x128xbf16>
    %c672 = arith.constant 672 : index
    %c0_133 = arith.constant 0 : index
    %205 = vector.load %arg8[%c672, %c0_133] : memref<816x128xbf16, #tpu.memory_space<vmem>>, vector<48x128xbf16>
    tpu.vector_store %arg8[%c672, %c0_133], %204 {strides = array<i32>} : memref<816x128xbf16, #tpu.memory_space<vmem>>, vector<48x128xbf16>,
    %c112_i32_134 = arith.constant 112 : i32
    %206 = tpu.dynamic_rotate %105 by %c112_i32_134 dim 1 : vector<48x128xf32>, i32 -> vector<48x128xf32>
    %c15_135 = arith.constant 15 : index
    %c0_136 = arith.constant 0 : index
    %c0_137 = arith.constant 0 : index
    %207 = vector.load %arg2[%c15_135, %c0_136, %c0_137] : memref<17x1x128xf32, #tpu.memory_space<vmem>>, vector<1x1x128xf32>
    %208 = vector.shape_cast %207 : vector<1x1x128xf32> to vector<1x128xf32>
    %209 = vector.broadcast %208 : vector<1x128xf32> to vector<48x128xf32>
    %210 = arith.mulf %206, %209 : vector<48x128xf32>
    %211 = arith.truncf %210 : vector<48x128xf32> to vector<48x128xbf16>
    %c720 = arith.constant 720 : index
    %c0_138 = arith.constant 0 : index
    %212 = vector.load %arg8[%c720, %c0_138] : memref<816x128xbf16, #tpu.memory_space<vmem>>, vector<48x128xbf16>
    tpu.vector_store %arg8[%c720, %c0_138], %211 {strides = array<i32>} : memref<816x128xbf16, #tpu.memory_space<vmem>>, vector<48x128xbf16>,
    %c110_i32_139 = arith.constant 110 : i32
    %213 = tpu.dynamic_rotate %105 by %c110_i32_139 dim 1 : vector<48x128xf32>, i32 -> vector<48x128xf32>
    %c16_140 = arith.constant 16 : index
    %c0_141 = arith.constant 0 : index
    %c0_142 = arith.constant 0 : index
    %214 = vector.load %arg2[%c16_140, %c0_141, %c0_142] : memref<17x1x128xf32, #tpu.memory_space<vmem>>, vector<1x1x128xf32>
    %215 = vector.shape_cast %214 : vector<1x1x128xf32> to vector<1x128xf32>
    %216 = vector.broadcast %215 : vector<1x128xf32> to vector<48x128xf32>
    %217 = arith.mulf %213, %216 : vector<48x128xf32>
    %218 = arith.truncf %217 : vector<48x128xf32> to vector<48x128xbf16>
    %c768 = arith.constant 768 : index
    %c0_143 = arith.constant 0 : index
    %219 = vector.load %arg8[%c768, %c0_143] : memref<816x128xbf16, #tpu.memory_space<vmem>>, vector<48x128xbf16>
    tpu.vector_store %arg8[%c768, %c0_143], %218 {strides = array<i32>} : memref<816x128xbf16, #tpu.memory_space<vmem>>, vector<48x128xbf16>,
    %c0_144 = arith.constant 0 : index
    %c0_145 = arith.constant 0 : index
    %220 = vector.load %arg4[%c0_144, %c0_145] : memref<41x816xbf16, #tpu.memory_space<vmem>>, vector<41x816xbf16>
    %c0_146 = arith.constant 0 : index
    %c0_147 = arith.constant 0 : index
    %221 = vector.load %arg8[%c0_146, %c0_147] : memref<816x128xbf16, #tpu.memory_space<vmem>>, vector<816x128xbf16>
    %cst_148 = arith.constant dense<0.000000e+00> : vector<41x128xf32>
    %222 = tpu.matmul %220, %221, %cst_148 {dimension_numbers = #tpu.dot_dimension_numbers<[1], [0], [0], [1], [0, 0, 1, 1], [], []>} : vector<41x816xbf16>, vector<816x128xbf16>, vector<41x128xf32> -> vector<41x128xf32>
    %cst_149 = arith.constant 0.000000e+00 : f32
    %223 = vector.broadcast %cst_149 : f32 to vector<41x128xf32>
    %224 = arith.maximumf %222, %223 : vector<41x128xf32>
    %c0_150 = arith.constant 0 : index
    %c0_151 = arith.constant 0 : index
    %225 = vector.load %arg5[%c0_150, %c0_151] : memref<1x41xbf16, #tpu.memory_space<vmem>>, vector<1x41xbf16>
    %226 = arith.truncf %224 : vector<41x128xf32> to vector<41x128xbf16>
    %cst_152 = arith.constant dense<0.000000e+00> : vector<1x128xf32>
    %227 = tpu.matmul %225, %226, %cst_152 {dimension_numbers = #tpu.dot_dimension_numbers<[1], [0], [0], [1], [0, 0, 1, 1], [], []>} : vector<1x41xbf16>, vector<41x128xbf16>, vector<1x128xf32> -> vector<1x128xf32>
    %228 = math.tanh %227 : vector<1x128xf32>
    %c0_153 = arith.constant 0 : index
    %c0_154 = arith.constant 0 : index
    %229 = vector.load %arg6[%c0_153, %c0_154] : memref<1x128xf32, #tpu.memory_space<vmem>>, vector<1x128xf32>
    tpu.vector_store %arg6[%c0_153, %c0_154], %228 {strides = array<i32>} : memref<1x128xf32, #tpu.memory_space<vmem>>, vector<1x128xf32>,
    return
  }
  func.func @transform_0(%arg0: i32) -> (i32, i32) {
    %c0_i32 = arith.constant 0 : i32
    %c0_i32_0 = arith.constant 0 : i32
    return %c0_i32, %arg0 : i32, i32
  }
  func.func @transform_1(%arg0: i32) -> (i32, i32, i32) {
    %c0_i32 = arith.constant 0 : i32
    %c0_i32_0 = arith.constant 0 : i32
    %c0_i32_1 = arith.constant 0 : i32
    %c0_i32_2 = arith.constant 0 : i32
    return %c0_i32, %c0_i32_0, %c0_i32_1 : i32, i32, i32
  }
  func.func @transform_2(%arg0: i32) -> (i32, i32) {
    %c0_i32 = arith.constant 0 : i32
    %c0_i32_0 = arith.constant 0 : i32
    %c0_i32_1 = arith.constant 0 : i32
    return %c0_i32, %c0_i32_0 : i32, i32
  }
  func.func @transform_3(%arg0: i32) -> (i32, i32) {
    %c0_i32 = arith.constant 0 : i32
    %c0_i32_0 = arith.constant 0 : i32
    %c0_i32_1 = arith.constant 0 : i32
    return %c0_i32, %c0_i32_0 : i32, i32
  }
  func.func @transform_4(%arg0: i32) -> (i32, i32) {
    %c0_i32 = arith.constant 0 : i32
    %c0_i32_0 = arith.constant 0 : i32
    %c0_i32_1 = arith.constant 0 : i32
    return %c0_i32, %c0_i32_0 : i32, i32
  }
  func.func @transform_5(%arg0: i32) -> (i32, i32) {
    %c0_i32 = arith.constant 0 : i32
    %c0_i32_0 = arith.constant 0 : i32
    return %c0_i32, %arg0 : i32, i32
  }
}

</mosaic_0001>

<llo_original>
// kernel: tpu_custom_call.1
$region0: #{tpu_custom_call.1}
  #allocation0 [shape = 'u32[]', space=smem, size = 0x4, offset = 0x4, fixed_abs, tag = 'smem constant byte address 0x4 - core index']
  #allocation1 [shape = 'u32[144,128]{1,0:T(1,128)}', space=vmem, size = 0x12000, scoped, tag = 'internal scratch']
  #allocation2 [shape = 'f32[144,128]{1,0:T(8,128)}', space=vmem, size = 0x12000, scoped, tag = 'scratch operand']
  #allocation3 [shape = 'bf16[816,128]{1,0:T(8,128)(2,1)}', space=vmem, size = 0x33000, scoped, tag = 'scratch operand']
  %s0 = inlined_call_operand.hbm [shape: f32[8,128], index: 0, kind: input, shape index: {}]
  %s1 = inlined_call_operand.hbm [shape: f32[17,1,128], index: 1, kind: input, shape index: {}]
  %s2 = inlined_call_operand.hbm [shape: bf16[48,144], index: 2, kind: input, shape index: {}]
  %s3 = inlined_call_operand.hbm [shape: bf16[41,816], index: 3, kind: input, shape index: {}]
  %s4 = inlined_call_operand.vmem [shape: bf16[1,41], index: 4, kind: input, shape index: {}]
  %s5 = inlined_call_operand.hbm [shape: f32[1,128], index: 5, kind: output, shape index: {}]
  %s6 = sld [smem:[#allocation0]]
  $region46: #{tpu_custom_call.1} parent=0
    _
  %s8 = ssub.s32 1, %s6
  %s9 = scalar_select 0, %s8, %s6
  $region1: #{tpu_custom_call.1} parent=0
    #allocation4 [shape = 'u8[4096]{0}', space=vmem, size = 0x1000, scoped, tag = 'input window, operand 0, single buffered']
    #allocation5 [shape = 's32[1]{0}', space=sflag, size = 0x4, scoped, tag = 'scoped memory for tpu_custom_call.1']
    #allocation6 [shape = 's32[1]{0}', space=sflag, size = 0x4, scoped, tag = 'scoped memory for tpu_custom_call.1']
    #allocation7 [shape = 'u8[8704]{0}', space=vmem, size = 0x2400, scoped, tag = 'input window, operand 1, single buffered']
    #allocation8 [shape = 's32[1]{0}', space=sflag, size = 0x4, scoped, tag = 'scoped memory for tpu_custom_call.1']
    #allocation9 [shape = 'u8[24576]{0}', space=vmem, size = 0x6000, scoped, tag = 'input window, operand 2, single buffered']
    #allocation10 [shape = 'u8[86016]{0}', space=vmem, size = 0x15000, scoped, tag = 'input window, operand 3, single buffered']
    #allocation11 [shape = 's32[1]{0}', space=sflag, size = 0x4, scoped, tag = 'scoped memory for tpu_custom_call.1']
    #allocation12 [shape = 'u8[512]{0}', space=vmem, size = 0x400, scoped, tag = 'output window, operand 0, single buffered']
    %10 = vsyncpa [#allocation5], 0
    %11 = vsyncpa [#allocation8], 0
    %12 = vsyncpa [#allocation11], 0
    %13 = vsyncpa [#allocation6], 0
    // Predicated region
    $region2: #{tpu_custom_call.1} parent=1 // pred_check
      _
    $region3: #{tpu_custom_call.1} parent=1 // pred_check_branch
      %15 = sbr.rel (0) target = $region5
    $region4: #{tpu_custom_call.1} parent=1 // pred_region
      %s17 = ssub.s32 128, 128
      %18 = vsyncadd [#allocation5], %s17
      %s20 = sshll.u32 [#allocation4], 4
      %s21 = int_to_ptr.vmem [resolvable:$true] %s20
      %23 = dma.hbm_to_vmem [thread:$0]  %s0, 128, %s21, [#allocation5]
    $region5: #{tpu_custom_call.1} parent=1 // pred_fallthru
      _
    // Predicated region
    $region6: #{tpu_custom_call.1} parent=1 // pred_check
      _
    $region7: #{tpu_custom_call.1} parent=1 // pred_check_branch
      %25 = sbr.rel (0) target = $region9
    $region8: #{tpu_custom_call.1} parent=1 // pred_region
      %s27 = ssub.s32 272, 272
      %28 = vsyncadd [#allocation8], %s27
      %s29 = sshll.u32 [#allocation7], 4
      %s30 = int_to_ptr.vmem [resolvable:$true] %s29
      %35 = dma.hbm_to_vmem [thread:$0]  %s1, 272, %s30, [#allocation8], 16, 16, 1
    $region9: #{tpu_custom_call.1} parent=1 // pred_fallthru
      _
    // Predicated region
    $region10: #{tpu_custom_call.1} parent=1 // pred_check
      _
    $region11: #{tpu_custom_call.1} parent=1 // pred_check_branch
      %37 = sbr.rel (0) target = $region13
    $region12: #{tpu_custom_call.1} parent=1 // pred_region
      %s39 = ssub.s32 768, 768
      %40 = vsyncadd [#allocation8], %s39
      %s41 = sshll.u32 [#allocation9], 4
      %s42 = int_to_ptr.vmem [resolvable:$true] %s41
      %47 = dma.hbm_to_vmem [thread:$0]  %s2, 768, %s42, [#allocation8], 128, 128, 8
    $region13: #{tpu_custom_call.1} parent=1 // pred_fallthru
      _
    // Predicated region
    $region14: #{tpu_custom_call.1} parent=1 // pred_check
      _
    $region15: #{tpu_custom_call.1} parent=1 // pred_check_branch
      %49 = sbr.rel (0) target = $region17
    $region16: #{tpu_custom_call.1} parent=1 // pred_region
      %s51 = ssub.s32 2688, 2688
      %52 = vsyncadd [#allocation11], %s51
      %s53 = sshll.u32 [#allocation10], 4
      %s54 = int_to_ptr.vmem [resolvable:$true] %s53
      %59 = dma.hbm_to_vmem [thread:$0]  %s3, 2688, %s54, [#allocation11], 448, 448, 28
    $region17: #{tpu_custom_call.1} parent=1 // pred_fallthru
      _
    // Predicated region
    $region18: #{tpu_custom_call.1} parent=1 // pred_check
      _
    $region19: #{tpu_custom_call.1} parent=1 // pred_check_branch
      %61 = sbr.rel (0) target = $region21
    $region20: #{tpu_custom_call.1} parent=1 // pred_region
      _
    $region21: #{tpu_custom_call.1} parent=1 // pred_fallthru
      _
    // Predicated region
    $region22: #{tpu_custom_call.1} parent=1 // pred_check
      _
    $region23: #{tpu_custom_call.1} parent=1 // pred_check_branch
      %63 = sbr.rel (0) target = $region25
    $region24: #{tpu_custom_call.1} parent=1 // pred_region
      %64 = dma.done [#allocation5], 128
    $region25: #{tpu_custom_call.1} parent=1 // pred_fallthru
      _
    // Predicated region
    $region26: #{tpu_custom_call.1} parent=1 // pred_check
      _
    $region27: #{tpu_custom_call.1} parent=1 // pred_check_branch
      %66 = sbr.rel (0) target = $region29
    $region28: #{tpu_custom_call.1} parent=1 // pred_region
      %67 = dma.done [#allocation8], 272
    $region29: #{tpu_custom_call.1} parent=1 // pred_fallthru
      _
    // Predicated region
    $region30: #{tpu_custom_call.1} parent=1 // pred_check
      _
    $region31: #{tpu_custom_call.1} parent=1 // pred_check_branch
      %69 = sbr.rel (0) target = $region33
    $region32: #{tpu_custom_call.1} parent=1 // pred_region
      %70 = dma.done [#allocation8], 768
    $region33: #{tpu_custom_call.1} parent=1 // pred_fallthru
      _
    // Predicated region
    $region34: #{tpu_custom_call.1} parent=1 // pred_check
      _
    $region35: #{tpu_custom_call.1} parent=1 // pred_check_branch
      %72 = sbr.rel (0) target = $region37
    $region36: #{tpu_custom_call.1} parent=1 // pred_region
      %73 = dma.done [#allocation11], 2688
    $region37: #{tpu_custom_call.1} parent=1 // pred_fallthru
      _
    %v75 = vld [vmem:[#allocation4] sm:$0xff]
    %76 = vst [vmem:[#allocation2] sm:$0xff] %v75
    %77 = vrot.lane.b32.xlu0 %v75, 9
    %v78 = vpop.permute.xlu0 %77
    %s79 = scalar_lea.vmem [#allocation7], 1
    %v80 = vld [vmem:[%s79] sm:$0x1]
    %v82 = vlaneseq
    %v83 = vshrl.u32 %v82, 7
    %v84 = vsub.s32 0, %v83
    %v85 = vrot.slane %v80, %v84
    %v87 = vmul.f32 %v78, %v85
    %88 = vst [vmem:[#allocation2 + $0x8] sm:$0xff] %v87
    %89 = vrot.lane.b32.xlu0 %v75, 8
    %v90 = vpop.permute.xlu0 %89
    %s91 = scalar_lea.vmem [#allocation7], 2
    %v92 = vld [vmem:[%s91] sm:$0x1]
    %v94 = vlaneseq
    %v95 = vshrl.u32 %v94, 7
    %v96 = vsub.s32 0, %v95
    %v97 = vrot.slane %v92, %v96
    %v99 = vmul.f32 %v90, %v97
    %100 = vst [vmem:[#allocation2 + $0x10] sm:$0xff] %v99
    %101 = vrot.lane.b32.xlu0 %v75, 7
    %v102 = vpop.permute.xlu0 %101
    %s103 = scalar_lea.vmem [#allocation7], 3
    %v104 = vld [vmem:[%s103] sm:$0x1]
    %v106 = vlaneseq
    %v107 = vshrl.u32 %v106, 7
    %v108 = vsub.s32 0, %v107
    %v109 = vrot.slane %v104, %v108
    %v111 = vmul.f32 %v102, %v109
    %112 = vst [vmem:[#allocation2 + $0x18] sm:$0xff] %v111
    %113 = vrot.lane.b32.xlu0 %v75, 1
    %v114 = vpop.permute.xlu0 %113
    %s115 = scalar_lea.vmem [#allocation7], 4
    %v116 = vld [vmem:[%s115] sm:$0x1]
    %v118 = vlaneseq
    %v119 = vshrl.u32 %v118, 7
    %v120 = vsub.s32 0, %v119
    %v121 = vrot.slane %v116, %v120
    %v123 = vmul.f32 %v114, %v121
    %124 = vst [vmem:[#allocation2 + $0x20] sm:$0xff] %v123
    %125 = vrot.lane.b32.xlu0 %v75, 127
    %v126 = vpop.permute.xlu0 %125
    %s127 = scalar_lea.vmem [#allocation7], 5
    %v128 = vld [vmem:[%s127] sm:$0x1]
    %v130 = vlaneseq
    %v131 = vshrl.u32 %v130, 7
    %v132 = vsub.s32 0, %v131
    %v133 = vrot.slane %v128, %v132
    %v135 = vmul.f32 %v126, %v133
    %136 = vst [vmem:[#allocation2 + $0x28] sm:$0xff] %v135
    %137 = vrot.lane.b32.xlu0 %v75, 121
    %v138 = vpop.permute.xlu0 %137
    %s139 = scalar_lea.vmem [#allocation7], 6
    %v140 = vld [vmem:[%s139] sm:$0x1]
    %v142 = vlaneseq
    %v143 = vshrl.u32 %v142, 7
    %v144 = vsub.s32 0, %v143
    %v145 = vrot.slane %v140, %v144
    %v147 = vmul.f32 %v138, %v145
    %148 = vst [vmem:[#allocation2 + $0x30] sm:$0xff] %v147
    %149 = vrot.lane.b32.xlu0 %v75, 120
    %v150 = vpop.permute.xlu0 %149
    %s151 = scalar_lea.vmem [#allocation7], 7
    %v152 = vld [vmem:[%s151] sm:$0x1]
    %v154 = vlaneseq
    %v155 = vshrl.u32 %v154, 7
    %v156 = vsub.s32 0, %v155
    %v157 = vrot.slane %v152, %v156
    %v159 = vmul.f32 %v150, %v157
    %160 = vst [vmem:[#allocation2 + $0x38] sm:$0xff] %v159
    %161 = vrot.lane.b32.xlu0 %v75, 119
    %v162 = vpop.permute.xlu0 %161
    %s163 = scalar_lea.vmem [#allocation7], 8
    %v164 = vld [vmem:[%s163] sm:$0x1]
    %v166 = vlaneseq
    %v167 = vshrl.u32 %v166, 7
    %v168 = vsub.s32 0, %v167
    %v169 = vrot.slane %v164, %v168
    %v171 = vmul.f32 %v162, %v169
    %172 = vst [vmem:[#allocation2 + $0x40] sm:$0xff] %v171
    %173 = vrot.lane.b32.xlu0 %v75, 18
    %v174 = vpop.permute.xlu0 %173
    %s175 = scalar_lea.vmem [#allocation7], 9
    %v176 = vld [vmem:[%s175] sm:$0x1]
    %v178 = vlaneseq
    %v179 = vshrl.u32 %v178, 7
    %v180 = vsub.s32 0, %v179
    %v181 = vrot.slane %v176, %v180
    %v183 = vmul.f32 %v174, %v181
    %184 = vst [vmem:[#allocation2 + $0x48] sm:$0xff] %v183
    %185 = vrot.lane.b32.xlu0 %v75, 16
    %v186 = vpop.permute.xlu0 %185
    %s187 = scalar_lea.vmem [#allocation7], 10
    %v188 = vld [vmem:[%s187] sm:$0x1]
    %v190 = vlaneseq
    %v191 = vshrl.u32 %v190, 7
    %v192 = vsub.s32 0, %v191
    %v193 = vrot.slane %v188, %v192
    %v195 = vmul.f32 %v186, %v193
    %196 = vst [vmem:[#allocation2 + $0x50] sm:$0xff] %v195
    %197 = vrot.lane.b32.xlu0 %v75, 14
    %v198 = vpop.permute.xlu0 %197
    %s199 = scalar_lea.vmem [#allocation7], 11
    %v200 = vld [vmem:[%s199] sm:$0x1]
    %v202 = vlaneseq
    %v203 = vshrl.u32 %v202, 7
    %v204 = vsub.s32 0, %v203
    %v205 = vrot.slane %v200, %v204
    %v207 = vmul.f32 %v198, %v205
    %208 = vst [vmem:[#allocation2 + $0x58] sm:$0xff] %v207
    %209 = vrot.lane.b32.xlu0 %v75, 2
    %v210 = vpop.permute.xlu0 %209
    %s211 = scalar_lea.vmem [#allocation7], 12
    %v212 = vld [vmem:[%s211] sm:$0x1]
    %v214 = vlaneseq
    %v215 = vshrl.u32 %v214, 7
    %v216 = vsub.s32 0, %v215
    %v217 = vrot.slane %v212, %v216
    %v219 = vmul.f32 %v210, %v217
    %220 = vst [vmem:[#allocation2 + $0x60] sm:$0xff] %v219
    %221 = vrot.lane.b32.xlu0 %v75, 126
    %v222 = vpop.permute.xlu0 %221
    %s223 = scalar_lea.vmem [#allocation7], 13
    %v224 = vld [vmem:[%s223] sm:$0x1]
    %v226 = vlaneseq
    %v227 = vshrl.u32 %v226, 7
    %v228 = vsub.s32 0, %v227
    %v229 = vrot.slane %v224, %v228
    %v231 = vmul.f32 %v222, %v229
    %232 = vst [vmem:[#allocation2 + $0x68] sm:$0xff] %v231
    %233 = vrot.lane.b32.xlu0 %v75, 114
    %v234 = vpop.permute.xlu0 %233
    %s235 = scalar_lea.vmem [#allocation7], 14
    %v236 = vld [vmem:[%s235] sm:$0x1]
    %v238 = vlaneseq
    %v239 = vshrl.u32 %v238, 7
    %v240 = vsub.s32 0, %v239
    %v241 = vrot.slane %v236, %v240
    %v243 = vmul.f32 %v234, %v241
    %244 = vst [vmem:[#allocation2 + $0x70] sm:$0xff] %v243
    %245 = vrot.lane.b32.xlu0 %v75, 112
    %v246 = vpop.permute.xlu0 %245
    %s247 = scalar_lea.vmem [#allocation7], 15
    %v248 = vld [vmem:[%s247] sm:$0x1]
    %v250 = vlaneseq
    %v251 = vshrl.u32 %v250, 7
    %v252 = vsub.s32 0, %v251
    %v253 = vrot.slane %v248, %v252
    %v255 = vmul.f32 %v246, %v253
    %256 = vst [vmem:[#allocation2 + $0x78] sm:$0xff] %v255
    %257 = vrot.lane.b32.xlu0 %v75, 110
    %v258 = vpop.permute.xlu0 %257
    %s259 = scalar_lea.vmem [#allocation7], 16
    %v260 = vld [vmem:[%s259] sm:$0x1]
    %v262 = vlaneseq
    %v263 = vshrl.u32 %v262, 7
    %v264 = vsub.s32 0, %v263
    %v265 = vrot.slane %v260, %v264
    %v267 = vmul.f32 %v258, %v265
    %268 = vst [vmem:[#allocation2 + $0x80] sm:$0xff] %v267
    %269 = vst [vmem:[#allocation2 + $0x88] sm:$0xff] 1.0
    %v270 = vld [vmem:[#allocation9] sm:$0xff]
    %v271 = vld [vmem:[#allocation9 + $0x8] sm:$0xff]
    %v272 = vld [vmem:[#allocation9 + $0x10] sm:$0xff]
    %v273 = vld [vmem:[#allocation9 + $0x18] sm:$0xff]
    %v274 = vld [vmem:[#allocation9 + $0x20] sm:$0xff]
    %v275 = vld [vmem:[#allocation9 + $0x28] sm:$0xff]
    %v276 = vld [vmem:[#allocation2] sm:$0xff]
    %v277 = vld [vmem:[#allocation2 + $0x8] sm:$0xff]
    %v278 = vld [vmem:[#allocation2 + $0x10] sm:$0xff]
    %v279 = vld [vmem:[#allocation2 + $0x18] sm:$0xff]
    %v280 = vld [vmem:[#allocation2 + $0x20] sm:$0xff]
    %v281 = vld [vmem:[#allocation2 + $0x28] sm:$0xff]
    %v282 = vld [vmem:[#allocation2 + $0x30] sm:$0xff]
    %v283 = vld [vmem:[#allocation2 + $0x38] sm:$0xff]
    %v284 = vld [vmem:[#allocation2 + $0x40] sm:$0xff]
    %v285 = vld [vmem:[#allocation2 + $0x48] sm:$0xff]
    %v286 = vld [vmem:[#allocation2 + $0x50] sm:$0xff]
    %v287 = vld [vmem:[#allocation2 + $0x58] sm:$0xff]
    %v288 = vld [vmem:[#allocation2 + $0x60] sm:$0xff]
    %v289 = vld [vmem:[#allocation2 + $0x68] sm:$0xff]
    %v290 = vld [vmem:[#allocation2 + $0x70] sm:$0xff]
    %v291 = vld [vmem:[#allocation2 + $0x78] sm:$0xff]
    %v292 = vld [vmem:[#allocation2 + $0x80] sm:$0xff]
    %v293 = vld [vmem:[#allocation2 + $0x88] sm:$0xff]
    %v294 = vpack.c.bf16 %v277, %v276
    %v295 = vpack.c.bf16 %v279, %v278
    %v296 = vpack.c.bf16 %v281, %v280
    %v297 = vpack.c.bf16 %v283, %v282
    %v298 = vpack.c.bf16 %v285, %v284
    %v299 = vpack.c.bf16 %v287, %v286
    %v300 = vpack.c.bf16 %v289, %v288
    %v301 = vpack.c.bf16 %v291, %v290
    %v302 = vpack.c.bf16 %v293, %v292
    %v309 = vunpack.c.l.b16 %v270
    %v310 = vunpack.c.h.b16 %v270
    %v311 = vunpack.c.l.b16 %v271
    %v312 = vunpack.c.h.b16 %v271
    %v313 = vunpack.c.l.b16 %v272
    %v314 = vunpack.c.h.b16 %v272
    %v315 = vunpack.c.l.b16 %v273
    %v316 = vunpack.c.h.b16 %v273
    %v317 = vunpack.c.l.b16 %v274
    %v318 = vunpack.c.h.b16 %v274
    %v319 = vunpack.c.l.b16 %v275
    %v320 = vunpack.c.h.b16 %v275
    %v321 = vpack.c.b16 %v311, %v309
    %v322 = vpack.c.b16 %v312, %v310
    %v323 = vpack.c.b16 %v315, %v313
    %v324 = vpack.c.b16 %v316, %v314
    %v325 = vpack.c.b16 %v319, %v317
    %v326 = vpack.c.b16 %v320, %v318
    %vm330 = vcmask 130048
    %v332 = vsel %vm330, %v322, 0
    %v335 = vsel %vm330, %v324, 0
    %v338 = vsel %vm330, %v326, 0
    %340 = vmatprep.subr.bf16.mxu0 0
    %341 = vmatpush1.bf16.msra.mxu0 %v301
    %342 = vmatprep.subr.bf16.mxu0 0
    %343 = vmatpush1.bf16.msra.mxu0 %v300
    %344 = vmatprep.subr.bf16.mxu0 0
    %345 = vmatpush1.bf16.msra.mxu0 %v299
    %346 = vmatprep.subr.bf16.mxu0 0
    %347 = vmatpush1.bf16.msra.mxu0 %v298
    %348 = vmatprep.subr.bf16.mxu0 0
    %349 = vmatpush1.bf16.msra.mxu0 %v297
    %350 = vmatprep.subr.bf16.mxu0 0
    %351 = vmatpush1.bf16.msra.mxu0 %v296
    %352 = vmatprep.subr.bf16.mxu0 0
    %353 = vmatpush1.bf16.msra.mxu0 %v295
    %354 = vmatprep.subr.bf16.mxu0 0
    %355 = vmatpush1.bf16.msra.mxu0 %v294
    %356 = vmatprep.subr.bf16.mxu0 0
    %357 = vmatpush2.bf16.msra.mxu0 0
    %358 = vmatprep.subr.bf16.mxu0 0
    %359 = vmatpush2.bf16.msra.mxu0 0
    %360 = vmatprep.subr.bf16.mxu0 0
    %361 = vmatpush2.bf16.msra.mxu0 0
    %362 = vmatprep.subr.bf16.mxu0 0
    %363 = vmatpush2.bf16.msra.mxu0 0
    %364 = vmatprep.subr.bf16.mxu0 0
    %365 = vmatpush2.bf16.msra.mxu0 0
    %366 = vmatprep.subr.bf16.mxu0 0
    %367 = vmatpush2.bf16.msra.mxu0 0
    %368 = vmatprep.subr.bf16.mxu0 0
    %369 = vmatpush2.bf16.msra.mxu0 0
    %370 = vmatprep.subr.bf16.mxu0 0
    %371 = vmatpush2.bf16.msra.mxu0 %v302
    %372 = vmatprep.mubr.bf16.mxu0 %v332
    %373 = vmatmul.mubr.bf16.gmra.mxu0 %v321
    %v374 = vpop.f32.mrf.mxu0
    %v375 = vadd.f32 0.0, %v374
    %v376 = vpop.f32.mrf.mxu0
    %v377 = vpop.f32.mrf.mxu0
    %v378 = vadd.f32 0.0, %v377
    %v379 = vpop.f32.mrf.mxu0
    %380 = vmatprep.mubr.bf16.mxu0 %v335
    %381 = vmatmul.mubr.bf16.gmra.mxu0 %v323
    %v382 = vpop.f32.mrf.mxu0
    %v383 = vadd.f32 0.0, %v382
    %v384 = vpop.f32.mrf.mxu0
    %v385 = vpop.f32.mrf.mxu0
    %v386 = vadd.f32 0.0, %v385
    %v387 = vpop.f32.mrf.mxu0
    %388 = vmatprep.mubr.bf16.mxu0 %v338
    %389 = vmatmul.mubr.bf16.gmra.mxu0 %v325
    %v390 = vpop.f32.mrf.mxu0
    %v391 = vadd.f32 0.0, %v390
    %v392 = vpop.f32.mrf.mxu0
    %v393 = vpop.f32.mrf.mxu0
    %v394 = vadd.f32 0.0, %v393
    %v395 = vpop.f32.mrf.mxu0
    %396 = vdwg.mxu0
    %v397 = vmax.f32 %v375, 0.0
    %v398 = vmax.f32 %v378, 0.0
    %v399 = vmax.f32 %v383, 0.0
    %v400 = vmax.f32 %v386, 0.0
    %v401 = vmax.f32 %v391, 0.0
    %v402 = vmax.f32 %v394, 0.0
    %v403 = vpack.c.bf16 %v398, %v397
    %v404 = vpack.c.bf16 %v400, %v399
    %v405 = vpack.c.bf16 %v402, %v401
    %v409 = vunpack.c.l.b16 %v403
    %v410 = vunpack.c.h.b16 %v403
    %v411 = vunpack.c.l.b16 %v404
    %v412 = vunpack.c.h.b16 %v404
    %v413 = vunpack.c.l.b16 %v405
    %v414 = vunpack.c.h.b16 %v405
    %v415 = vpack.c.b16 %v409, %v409
    %v416 = vpack.c.b16 %v410, %v410
    %v417 = vpack.c.b16 %v411, %v411
    %v418 = vpack.c.b16 %v412, %v412
    %v419 = vpack.c.b16 %v413, %v413
    %v420 = vpack.c.b16 %v414, %v414
    %427 = vst [vmem:[#allocation3] sm:$0xf] %v415
    %428 = vst [vmem:[#allocation3 + $0x4] sm:$0xf] %v416
    %429 = vst [vmem:[#allocation3 + $0x8] sm:$0xf] %v417
    %430 = vst [vmem:[#allocation3 + $0xc] sm:$0xf] %v418
    %431 = vst [vmem:[#allocation3 + $0x10] sm:$0xf] %v419
    %432 = vst [vmem:[#allocation3 + $0x14] sm:$0xf] %v420
    %433 = vrot.lane.b32.xlu0 %v397, 9
    %v434 = vpop.permute.xlu0 %433
    %435 = vrot.lane.b32.xlu0 %v398, 9
    %v436 = vpop.permute.xlu0 %435
    %437 = vrot.lane.b32.xlu0 %v399, 9
    %v438 = vpop.permute.xlu0 %437
    %439 = vrot.lane.b32.xlu0 %v400, 9
    %v440 = vpop.permute.xlu0 %439
    %441 = vrot.lane.b32.xlu0 %v401, 9
    %v442 = vpop.permute.xlu0 %441
    %443 = vrot.lane.b32.xlu0 %v402, 9
    %v444 = vpop.permute.xlu0 %443
    %v445 = vld [vmem:[%s79] sm:$0x1]
    %v447 = vlaneseq
    %v448 = vshrl.u32 %v447, 7
    %v449 = vsub.s32 0, %v448
    %v450 = vrot.slane %v445, %v449
    %v452 = vmul.f32 %v434, %v450
    %v453 = vmul.f32 %v436, %v450
    %v454 = vmul.f32 %v438, %v450
    %v455 = vmul.f32 %v440, %v450
    %v456 = vmul.f32 %v442, %v450
    %v457 = vmul.f32 %v444, %v450
    %v458 = vpack.c.bf16 %v453, %v452
    %v459 = vpack.c.bf16 %v455, %v454
    %v460 = vpack.c.bf16 %v457, %v456
    %v464 = vunpack.c.l.b16 %v458
    %v465 = vunpack.c.h.b16 %v458
    %v466 = vunpack.c.l.b16 %v459
    %v467 = vunpack.c.h.b16 %v459
    %v468 = vunpack.c.l.b16 %v460
    %v469 = vunpack.c.h.b16 %v460
    %v470 = vpack.c.b16 %v464, %v464
    %v471 = vpack.c.b16 %v465, %v465
    %v472 = vpack.c.b16 %v466, %v466
    %v473 = vpack.c.b16 %v467, %v467
    %v474 = vpack.c.b16 %v468, %v468
    %v475 = vpack.c.b16 %v469, %v469
    %482 = vst [vmem:[#allocation3 + $0x18] sm:$0xf] %v470
    %483 = vst [vmem:[#allocation3 + $0x1c] sm:$0xf] %v471
    %484 = vst [vmem:[#allocation3 + $0x20] sm:$0xf] %v472
    %485 = vst [vmem:[#allocation3 + $0x24] sm:$0xf] %v473
    %486 = vst [vmem:[#allocation3 + $0x28] sm:$0xf] %v474
    %487 = vst [vmem:[#allocation3 + $0x2c] sm:$0xf] %v475
    %488 = vrot.lane.b32.xlu0 %v397, 8
    %v489 = vpop.permute.xlu0 %488
    %490 = vrot.lane.b32.xlu0 %v398, 8
    %v491 = vpop.permute.xlu0 %490
    %492 = vrot.lane.b32.xlu0 %v399, 8
    %v493 = vpop.permute.xlu0 %492
    %494 = vrot.lane.b32.xlu0 %v400, 8
    %v495 = vpop.permute.xlu0 %494
    %496 = vrot.lane.b32.xlu0 %v401, 8
    %v497 = vpop.permute.xlu0 %496
    %498 = vrot.lane.b32.xlu0 %v402, 8
    %v499 = vpop.permute.xlu0 %498
    %v500 = vld [vmem:[%s91] sm:$0x1]
    %v502 = vlaneseq
    %v503 = vshrl.u32 %v502, 7
    %v504 = vsub.s32 0, %v503
    %v505 = vrot.slane %v500, %v504
    %v507 = vmul.f32 %v489, %v505
    %v508 = vmul.f32 %v491, %v505
    %v509 = vmul.f32 %v493, %v505
    %v510 = vmul.f32 %v495, %v505
    %v511 = vmul.f32 %v497, %v505
    %v512 = vmul.f32 %v499, %v505
    %v513 = vpack.c.bf16 %v508, %v507
    %v514 = vpack.c.bf16 %v510, %v509
    %v515 = vpack.c.bf16 %v512, %v511
    %v519 = vunpack.c.l.b16 %v513
    %v520 = vunpack.c.h.b16 %v513
    %v521 = vunpack.c.l.b16 %v514
    %v522 = vunpack.c.h.b16 %v514
    %v523 = vunpack.c.l.b16 %v515
    %v524 = vunpack.c.h.b16 %v515
    %v525 = vpack.c.b16 %v519, %v519
    %v526 = vpack.c.b16 %v520, %v520
    %v527 = vpack.c.b16 %v521, %v521
    %v528 = vpack.c.b16 %v522, %v522
    %v529 = vpack.c.b16 %v523, %v523
    %v530 = vpack.c.b16 %v524, %v524
    %537 = vst [vmem:[#allocation3 + $0x30] sm:$0xf] %v525
    %538 = vst [vmem:[#allocation3 + $0x34] sm:$0xf] %v526
    %539 = vst [vmem:[#allocation3 + $0x38] sm:$0xf] %v527
    %540 = vst [vmem:[#allocation3 + $0x3c] sm:$0xf] %v528
    %541 = vst [vmem:[#allocation3 + $0x40] sm:$0xf] %v529
    %542 = vst [vmem:[#allocation3 + $0x44] sm:$0xf] %v530
    %543 = vrot.lane.b32.xlu0 %v397, 7
    %v544 = vpop.permute.xlu0 %543
    %545 = vrot.lane.b32.xlu0 %v398, 7
    %v546 = vpop.permute.xlu0 %545
    %547 = vrot.lane.b32.xlu0 %v399, 7
    %v548 = vpop.permute.xlu0 %547
    %549 = vrot.lane.b32.xlu0 %v400, 7
    %v550 = vpop.permute.xlu0 %549
    %551 = vrot.lane.b32.xlu0 %v401, 7
    %v552 = vpop.permute.xlu0 %551
    %553 = vrot.lane.b32.xlu0 %v402, 7
    %v554 = vpop.permute.xlu0 %553
    %v555 = vld [vmem:[%s103] sm:$0x1]
    %v557 = vlaneseq
    %v558 = vshrl.u32 %v557, 7
    %v559 = vsub.s32 0, %v558
    %v560 = vrot.slane %v555, %v559
    %v562 = vmul.f32 %v544, %v560
    %v563 = vmul.f32 %v546, %v560
    %v564 = vmul.f32 %v548, %v560
    %v565 = vmul.f32 %v550, %v560
    %v566 = vmul.f32 %v552, %v560
    %v567 = vmul.f32 %v554, %v560
    %v568 = vpack.c.bf16 %v563, %v562
    %v569 = vpack.c.bf16 %v565, %v564
    %v570 = vpack.c.bf16 %v567, %v566
    %v574 = vunpack.c.l.b16 %v568
    %v575 = vunpack.c.h.b16 %v568
    %v576 = vunpack.c.l.b16 %v569
    %v577 = vunpack.c.h.b16 %v569
    %v578 = vunpack.c.l.b16 %v570
    %v579 = vunpack.c.h.b16 %v570
    %v580 = vpack.c.b16 %v574, %v574
    %v581 = vpack.c.b16 %v575, %v575
    %v582 = vpack.c.b16 %v576, %v576
    %v583 = vpack.c.b16 %v577, %v577
    %v584 = vpack.c.b16 %v578, %v578
    %v585 = vpack.c.b16 %v579, %v579
    %592 = vst [vmem:[#allocation3 + $0x48] sm:$0xf] %v580
    %593 = vst [vmem:[#allocation3 + $0x4c] sm:$0xf] %v581
    %594 = vst [vmem:[#allocation3 + $0x50] sm:$0xf] %v582
    %595 = vst [vmem:[#allocation3 + $0x54] sm:$0xf] %v583
    %596 = vst [vmem:[#allocation3 + $0x58] sm:$0xf] %v584
    %597 = vst [vmem:[#allocation3 + $0x5c] sm:$0xf] %v585
    %598 = vrot.lane.b32.xlu0 %v397, 1
    %v599 = vpop.permute.xlu0 %598
    %600 = vrot.lane.b32.xlu0 %v398, 1
    %v601 = vpop.permute.xlu0 %600
    %602 = vrot.lane.b32.xlu0 %v399, 1
    %v603 = vpop.permute.xlu0 %602
    %604 = vrot.lane.b32.xlu0 %v400, 1
    %v605 = vpop.permute.xlu0 %604
    %606 = vrot.lane.b32.xlu0 %v401, 1
    %v607 = vpop.permute.xlu0 %606
    %608 = vrot.lane.b32.xlu0 %v402, 1
    %v609 = vpop.permute.xlu0 %608
    %v610 = vld [vmem:[%s115] sm:$0x1]
    %v612 = vlaneseq
    %v613 = vshrl.u32 %v612, 7
    %v614 = vsub.s32 0, %v613
    %v615 = vrot.slane %v610, %v614
    %v617 = vmul.f32 %v599, %v615
    %v618 = vmul.f32 %v601, %v615
    %v619 = vmul.f32 %v603, %v615
    %v620 = vmul.f32 %v605, %v615
    %v621 = vmul.f32 %v607, %v615
    %v622 = vmul.f32 %v609, %v615
    %v623 = vpack.c.bf16 %v618, %v617
    %v624 = vpack.c.bf16 %v620, %v619
    %v625 = vpack.c.bf16 %v622, %v621
    %v629 = vunpack.c.l.b16 %v623
    %v630 = vunpack.c.h.b16 %v623
    %v631 = vunpack.c.l.b16 %v624
    %v632 = vunpack.c.h.b16 %v624
    %v633 = vunpack.c.l.b16 %v625
    %v634 = vunpack.c.h.b16 %v625
    %v635 = vpack.c.b16 %v629, %v629
    %v636 = vpack.c.b16 %v630, %v630
    %v637 = vpack.c.b16 %v631, %v631
    %v638 = vpack.c.b16 %v632, %v632
    %v639 = vpack.c.b16 %v633, %v633
    %v640 = vpack.c.b16 %v634, %v634
    %647 = vst [vmem:[#allocation3 + $0x60] sm:$0xf] %v635
    %648 = vst [vmem:[#allocation3 + $0x64] sm:$0xf] %v636
    %649 = vst [vmem:[#allocation3 + $0x68] sm:$0xf] %v637
    %650 = vst [vmem:[#allocation3 + $0x6c] sm:$0xf] %v638
    %651 = vst [vmem:[#allocation3 + $0x70] sm:$0xf] %v639
    %652 = vst [vmem:[#allocation3 + $0x74] sm:$0xf] %v640
    %653 = vrot.lane.b32.xlu0 %v397, 127
    %v654 = vpop.permute.xlu0 %653
    %655 = vrot.lane.b32.xlu0 %v398, 127
    %v656 = vpop.permute.xlu0 %655
    %657 = vrot.lane.b32.xlu0 %v399, 127
    %v658 = vpop.permute.xlu0 %657
    %659 = vrot.lane.b32.xlu0 %v400, 127
    %v660 = vpop.permute.xlu0 %659
    %661 = vrot.lane.b32.xlu0 %v401, 127
    %v662 = vpop.permute.xlu0 %661
    %663 = vrot.lane.b32.xlu0 %v402, 127
    %v664 = vpop.permute.xlu0 %663
    %v665 = vld [vmem:[%s127] sm:$0x1]
    %v667 = vlaneseq
    %v668 = vshrl.u32 %v667, 7
    %v669 = vsub.s32 0, %v668
    %v670 = vrot.slane %v665, %v669
    %v672 = vmul.f32 %v654, %v670
    %v673 = vmul.f32 %v656, %v670
    %v674 = vmul.f32 %v658, %v670
    %v675 = vmul.f32 %v660, %v670
    %v676 = vmul.f32 %v662, %v670
    %v677 = vmul.f32 %v664, %v670
    %v678 = vpack.c.bf16 %v673, %v672
    %v679 = vpack.c.bf16 %v675, %v674
    %v680 = vpack.c.bf16 %v677, %v676
    %v684 = vunpack.c.l.b16 %v678
    %v685 = vunpack.c.h.b16 %v678
    %v686 = vunpack.c.l.b16 %v679
    %v687 = vunpack.c.h.b16 %v679
    %v688 = vunpack.c.l.b16 %v680
    %v689 = vunpack.c.h.b16 %v680
    %v690 = vpack.c.b16 %v684, %v684
    %v691 = vpack.c.b16 %v685, %v685
    %v692 = vpack.c.b16 %v686, %v686
    %v693 = vpack.c.b16 %v687, %v687
    %v694 = vpack.c.b16 %v688, %v688
    %v695 = vpack.c.b16 %v689, %v689
    %702 = vst [vmem:[#allocation3 + $0x78] sm:$0xf] %v690
    %703 = vst [vmem:[#allocation3 + $0x7c] sm:$0xf] %v691
    %704 = vst [vmem:[#allocation3 + $0x80] sm:$0xf] %v692
    %705 = vst [vmem:[#allocation3 + $0x84] sm:$0xf] %v693
    %706 = vst [vmem:[#allocation3 + $0x88] sm:$0xf] %v694
    %707 = vst [vmem:[#allocation3 + $0x8c] sm:$0xf] %v695
    %708 = vrot.lane.b32.xlu0 %v397, 121
    %v709 = vpop.permute.xlu0 %708
    %710 = vrot.lane.b32.xlu0 %v398, 121
    %v711 = vpop.permute.xlu0 %710
    %712 = vrot.lane.b32.xlu0 %v399, 121
    %v713 = vpop.permute.xlu0 %712
    %714 = vrot.lane.b32.xlu0 %v400, 121
    %v715 = vpop.permute.xlu0 %714
    %716 = vrot.lane.b32.xlu0 %v401, 121
    %v717 = vpop.permute.xlu0 %716
    %718 = vrot.lane.b32.xlu0 %v402, 121
    %v719 = vpop.permute.xlu0 %718
    %v720 = vld [vmem:[%s139] sm:$0x1]
    %v722 = vlaneseq
    %v723 = vshrl.u32 %v722, 7
    %v724 = vsub.s32 0, %v723
    %v725 = vrot.slane %v720, %v724
    %v727 = vmul.f32 %v709, %v725
    %v728 = vmul.f32 %v711, %v725
    %v729 = vmul.f32 %v713, %v725
    %v730 = vmul.f32 %v715, %v725
    %v731 = vmul.f32 %v717, %v725
    %v732 = vmul.f32 %v719, %v725
    %v733 = vpack.c.bf16 %v728, %v727
    %v734 = vpack.c.bf16 %v730, %v729
    %v735 = vpack.c.bf16 %v732, %v731
    %v739 = vunpack.c.l.b16 %v733
    %v740 = vunpack.c.h.b16 %v733
    %v741 = vunpack.c.l.b16 %v734
    %v742 = vunpack.c.h.b16 %v734
    %v743 = vunpack.c.l.b16 %v735
    %v744 = vunpack.c.h.b16 %v735
    %v745 = vpack.c.b16 %v739, %v739
    %v746 = vpack.c.b16 %v740, %v740
    %v747 = vpack.c.b16 %v741, %v741
    %v748 = vpack.c.b16 %v742, %v742
    %v749 = vpack.c.b16 %v743, %v743
    %v750 = vpack.c.b16 %v744, %v744
    %757 = vst [vmem:[#allocation3 + $0x90] sm:$0xf] %v745
    %758 = vst [vmem:[#allocation3 + $0x94] sm:$0xf] %v746
    %759 = vst [vmem:[#allocation3 + $0x98] sm:$0xf] %v747
    %760 = vst [vmem:[#allocation3 + $0x9c] sm:$0xf] %v748
    %761 = vst [vmem:[#allocation3 + $0xa0] sm:$0xf] %v749
    %762 = vst [vmem:[#allocation3 + $0xa4] sm:$0xf] %v750
    %763 = vrot.lane.b32.xlu0 %v397, 120
    %v764 = vpop.permute.xlu0 %763
    %765 = vrot.lane.b32.xlu0 %v398, 120
    %v766 = vpop.permute.xlu0 %765
    %767 = vrot.lane.b32.xlu0 %v399, 120
    %v768 = vpop.permute.xlu0 %767
    %769 = vrot.lane.b32.xlu0 %v400, 120
    %v770 = vpop.permute.xlu0 %769
    %771 = vrot.lane.b32.xlu0 %v401, 120
    %v772 = vpop.permute.xlu0 %771
    %773 = vrot.lane.b32.xlu0 %v402, 120
    %v774 = vpop.permute.xlu0 %773
    %v775 = vld [vmem:[%s151] sm:$0x1]
    %v777 = vlaneseq
    %v778 = vshrl.u32 %v777, 7
    %v779 = vsub.s32 0, %v778
    %v780 = vrot.slane %v775, %v779
    %v782 = vmul.f32 %v764, %v780
    %v783 = vmul.f32 %v766, %v780
    %v784 = vmul.f32 %v768, %v780
    %v785 = vmul.f32 %v770, %v780
    %v786 = vmul.f32 %v772, %v780
    %v787 = vmul.f32 %v774, %v780
    %v788 = vpack.c.bf16 %v783, %v782
    %v789 = vpack.c.bf16 %v785, %v784
    %v790 = vpack.c.bf16 %v787, %v786
    %v794 = vunpack.c.l.b16 %v788
    %v795 = vunpack.c.h.b16 %v788
    %v796 = vunpack.c.l.b16 %v789
    %v797 = vunpack.c.h.b16 %v789
    %v798 = vunpack.c.l.b16 %v790
    %v799 = vunpack.c.h.b16 %v790
    %v800 = vpack.c.b16 %v794, %v794
    %v801 = vpack.c.b16 %v795, %v795
    %v802 = vpack.c.b16 %v796, %v796
    %v803 = vpack.c.b16 %v797, %v797
    %v804 = vpack.c.b16 %v798, %v798
    %v805 = vpack.c.b16 %v799, %v799
    %812 = vst [vmem:[#allocation3 + $0xa8] sm:$0xf] %v800
    %813 = vst [vmem:[#allocation3 + $0xac] sm:$0xf] %v801
    %814 = vst [vmem:[#allocation3 + $0xb0] sm:$0xf] %v802
    %815 = vst [vmem:[#allocation3 + $0xb4] sm:$0xf] %v803
    %816 = vst [vmem:[#allocation3 + $0xb8] sm:$0xf] %v804
    %817 = vst [vmem:[#allocation3 + $0xbc] sm:$0xf] %v805
    %818 = vrot.lane.b32.xlu0 %v397, 119
    %v819 = vpop.permute.xlu0 %818
    %820 = vrot.lane.b32.xlu0 %v398, 119
    %v821 = vpop.permute.xlu0 %820
    %822 = vrot.lane.b32.xlu0 %v399, 119
    %v823 = vpop.permute.xlu0 %822
    %824 = vrot.lane.b32.xlu0 %v400, 119
    %v825 = vpop.permute.xlu0 %824
    %826 = vrot.lane.b32.xlu0 %v401, 119
    %v827 = vpop.permute.xlu0 %826
    %828 = vrot.lane.b32.xlu0 %v402, 119
    %v829 = vpop.permute.xlu0 %828
    %v830 = vld [vmem:[%s163] sm:$0x1]
    %v832 = vlaneseq
    %v833 = vshrl.u32 %v832, 7
    %v834 = vsub.s32 0, %v833
    %v835 = vrot.slane %v830, %v834
    %v837 = vmul.f32 %v819, %v835
    %v838 = vmul.f32 %v821, %v835
    %v839 = vmul.f32 %v823, %v835
    %v840 = vmul.f32 %v825, %v835
    %v841 = vmul.f32 %v827, %v835
    %v842 = vmul.f32 %v829, %v835
    %v843 = vpack.c.bf16 %v838, %v837
    %v844 = vpack.c.bf16 %v840, %v839
    %v845 = vpack.c.bf16 %v842, %v841
    %v849 = vunpack.c.l.b16 %v843
    %v850 = vunpack.c.h.b16 %v843
    %v851 = vunpack.c.l.b16 %v844
    %v852 = vunpack.c.h.b16 %v844
    %v853 = vunpack.c.l.b16 %v845
    %v854 = vunpack.c.h.b16 %v845
    %v855 = vpack.c.b16 %v849, %v849
    %v856 = vpack.c.b16 %v850, %v850
    %v857 = vpack.c.b16 %v851, %v851
    %v858 = vpack.c.b16 %v852, %v852
    %v859 = vpack.c.b16 %v853, %v853
    %v860 = vpack.c.b16 %v854, %v854
    %867 = vst [vmem:[#allocation3 + $0xc0] sm:$0xf] %v855
    %868 = vst [vmem:[#allocation3 + $0xc4] sm:$0xf] %v856
    %869 = vst [vmem:[#allocation3 + $0xc8] sm:$0xf] %v857
    %870 = vst [vmem:[#allocation3 + $0xcc] sm:$0xf] %v858
    %871 = vst [vmem:[#allocation3 + $0xd0] sm:$0xf] %v859
    %872 = vst [vmem:[#allocation3 + $0xd4] sm:$0xf] %v860
    %873 = vrot.lane.b32.xlu0 %v397, 18
    %v874 = vpop.permute.xlu0 %873
    %875 = vrot.lane.b32.xlu0 %v398, 18
    %v876 = vpop.permute.xlu0 %875
    %877 = vrot.lane.b32.xlu0 %v399, 18
    %v878 = vpop.permute.xlu0 %877
    %879 = vrot.lane.b32.xlu0 %v400, 18
    %v880 = vpop.permute.xlu0 %879
    %881 = vrot.lane.b32.xlu0 %v401, 18
    %v882 = vpop.permute.xlu0 %881
    %883 = vrot.lane.b32.xlu0 %v402, 18
    %v884 = vpop.permute.xlu0 %883
    %v885 = vld [vmem:[%s175] sm:$0x1]
    %v887 = vlaneseq
    %v888 = vshrl.u32 %v887, 7
    %v889 = vsub.s32 0, %v888
    %v890 = vrot.slane %v885, %v889
    %v892 = vmul.f32 %v874, %v890
    %v893 = vmul.f32 %v876, %v890
    %v894 = vmul.f32 %v878, %v890
    %v895 = vmul.f32 %v880, %v890
    %v896 = vmul.f32 %v882, %v890
    %v897 = vmul.f32 %v884, %v890
    %v898 = vpack.c.bf16 %v893, %v892
    %v899 = vpack.c.bf16 %v895, %v894
    %v900 = vpack.c.bf16 %v897, %v896
    %v904 = vunpack.c.l.b16 %v898
    %v905 = vunpack.c.h.b16 %v898
    %v906 = vunpack.c.l.b16 %v899
    %v907 = vunpack.c.h.b16 %v899
    %v908 = vunpack.c.l.b16 %v900
    %v909 = vunpack.c.h.b16 %v900
    %v910 = vpack.c.b16 %v904, %v904
    %v911 = vpack.c.b16 %v905, %v905
    %v912 = vpack.c.b16 %v906, %v906
    %v913 = vpack.c.b16 %v907, %v907
    %v914 = vpack.c.b16 %v908, %v908
    %v915 = vpack.c.b16 %v909, %v909
    %922 = vst [vmem:[#allocation3 + $0xd8] sm:$0xf] %v910
    %923 = vst [vmem:[#allocation3 + $0xdc] sm:$0xf] %v911
    %924 = vst [vmem:[#allocation3 + $0xe0] sm:$0xf] %v912
    %925 = vst [vmem:[#allocation3 + $0xe4] sm:$0xf] %v913
    %926 = vst [vmem:[#allocation3 + $0xe8] sm:$0xf] %v914
    %927 = vst [vmem:[#allocation3 + $0xec] sm:$0xf] %v915
    %928 = vrot.lane.b32.xlu0 %v397, 16
    %v929 = vpop.permute.xlu0 %928
    %930 = vrot.lane.b32.xlu0 %v398, 16
    %v931 = vpop.permute.xlu0 %930
    %932 = vrot.lane.b32.xlu0 %v399, 16
    %v933 = vpop.permute.xlu0 %932
    %934 = vrot.lane.b32.xlu0 %v400, 16
    %v935 = vpop.permute.xlu0 %934
    %936 = vrot.lane.b32.xlu0 %v401, 16
    %v937 = vpop.permute.xlu0 %936
    %938 = vrot.lane.b32.xlu0 %v402, 16
    %v939 = vpop.permute.xlu0 %938
    %v940 = vld [vmem:[%s187] sm:$0x1]
    %v942 = vlaneseq
    %v943 = vshrl.u32 %v942, 7
    %v944 = vsub.s32 0, %v943
    %v945 = vrot.slane %v940, %v944
    %v947 = vmul.f32 %v929, %v945
    %v948 = vmul.f32 %v931, %v945
    %v949 = vmul.f32 %v933, %v945
    %v950 = vmul.f32 %v935, %v945
    %v951 = vmul.f32 %v937, %v945
    %v952 = vmul.f32 %v939, %v945
    %v953 = vpack.c.bf16 %v948, %v947
    %v954 = vpack.c.bf16 %v950, %v949
    %v955 = vpack.c.bf16 %v952, %v951
    %v959 = vunpack.c.l.b16 %v953
    %v960 = vunpack.c.h.b16 %v953
    %v961 = vunpack.c.l.b16 %v954
    %v962 = vunpack.c.h.b16 %v954
    %v963 = vunpack.c.l.b16 %v955
    %v964 = vunpack.c.h.b16 %v955
    %v965 = vpack.c.b16 %v959, %v959
    %v966 = vpack.c.b16 %v960, %v960
    %v967 = vpack.c.b16 %v961, %v961
    %v968 = vpack.c.b16 %v962, %v962
    %v969 = vpack.c.b16 %v963, %v963
    %v970 = vpack.c.b16 %v964, %v964
    %977 = vst [vmem:[#allocation3 + $0xf0] sm:$0xf] %v965
    %978 = vst [vmem:[#allocation3 + $0xf4] sm:$0xf] %v966
    %979 = vst [vmem:[#allocation3 + $0xf8] sm:$0xf] %v967
    %980 = vst [vmem:[#allocation3 + $0xfc] sm:$0xf] %v968
    %981 = vst [vmem:[#allocation3 + $0x100] sm:$0xf] %v969
    %982 = vst [vmem:[#allocation3 + $0x104] sm:$0xf] %v970
    %983 = vrot.lane.b32.xlu0 %v397, 14
    %v984 = vpop.permute.xlu0 %983
    %985 = vrot.lane.b32.xlu0 %v398, 14
    %v986 = vpop.permute.xlu0 %985
    %987 = vrot.lane.b32.xlu0 %v399, 14
    %v988 = vpop.permute.xlu0 %987
    %989 = vrot.lane.b32.xlu0 %v400, 14
    %v990 = vpop.permute.xlu0 %989
    %991 = vrot.lane.b32.xlu0 %v401, 14
    %v992 = vpop.permute.xlu0 %991
    %993 = vrot.lane.b32.xlu0 %v402, 14
    %v994 = vpop.permute.xlu0 %993
    %v995 = vld [vmem:[%s199] sm:$0x1]
    %v997 = vlaneseq
    %v998 = vshrl.u32 %v997, 7
    %v999 = vsub.s32 0, %v998
    %v1000 = vrot.slane %v995, %v999
    %v1002 = vmul.f32 %v984, %v1000
    %v1003 = vmul.f32 %v986, %v1000
    %v1004 = vmul.f32 %v988, %v1000
    %v1005 = vmul.f32 %v990, %v1000
    %v1006 = vmul.f32 %v992, %v1000
    %v1007 = vmul.f32 %v994, %v1000
    %v1008 = vpack.c.bf16 %v1003, %v1002
    %v1009 = vpack.c.bf16 %v1005, %v1004
    %v1010 = vpack.c.bf16 %v1007, %v1006
    %v1014 = vunpack.c.l.b16 %v1008
    %v1015 = vunpack.c.h.b16 %v1008
    %v1016 = vunpack.c.l.b16 %v1009
    %v1017 = vunpack.c.h.b16 %v1009
    %v1018 = vunpack.c.l.b16 %v1010
    %v1019 = vunpack.c.h.b16 %v1010
    %v1020 = vpack.c.b16 %v1014, %v1014
    %v1021 = vpack.c.b16 %v1015, %v1015
    %v1022 = vpack.c.b16 %v1016, %v1016
    %v1023 = vpack.c.b16 %v1017, %v1017
    %v1024 = vpack.c.b16 %v1018, %v1018
    %v1025 = vpack.c.b16 %v1019, %v1019
    %1032 = vst [vmem:[#allocation3 + $0x108] sm:$0xf] %v1020
    %1033 = vst [vmem:[#allocation3 + $0x10c] sm:$0xf] %v1021
    %1034 = vst [vmem:[#allocation3 + $0x110] sm:$0xf] %v1022
    %1035 = vst [vmem:[#allocation3 + $0x114] sm:$0xf] %v1023
    %1036 = vst [vmem:[#allocation3 + $0x118] sm:$0xf] %v1024
    %1037 = vst [vmem:[#allocation3 + $0x11c] sm:$0xf] %v1025
    %1038 = vrot.lane.b32.xlu0 %v397, 2
    %v1039 = vpop.permute.xlu0 %1038
    %1040 = vrot.lane.b32.xlu0 %v398, 2
    %v1041 = vpop.permute.xlu0 %1040
    %1042 = vrot.lane.b32.xlu0 %v399, 2
    %v1043 = vpop.permute.xlu0 %1042
    %1044 = vrot.lane.b32.xlu0 %v400, 2
    %v1045 = vpop.permute.xlu0 %1044
    %1046 = vrot.lane.b32.xlu0 %v401, 2
    %v1047 = vpop.permute.xlu0 %1046
    %1048 = vrot.lane.b32.xlu0 %v402, 2
    %v1049 = vpop.permute.xlu0 %1048
    %v1050 = vld [vmem:[%s211] sm:$0x1]
    %v1052 = vlaneseq
    %v1053 = vshrl.u32 %v1052, 7
    %v1054 = vsub.s32 0, %v1053
    %v1055 = vrot.slane %v1050, %v1054
    %v1057 = vmul.f32 %v1039, %v1055
    %v1058 = vmul.f32 %v1041, %v1055
    %v1059 = vmul.f32 %v1043, %v1055
    %v1060 = vmul.f32 %v1045, %v1055
    %v1061 = vmul.f32 %v1047, %v1055
    %v1062 = vmul.f32 %v1049, %v1055
    %v1063 = vpack.c.bf16 %v1058, %v1057
    %v1064 = vpack.c.bf16 %v1060, %v1059
    %v1065 = vpack.c.bf16 %v1062, %v1061
    %v1069 = vunpack.c.l.b16 %v1063
    %v1070 = vunpack.c.h.b16 %v1063
    %v1071 = vunpack.c.l.b16 %v1064
    %v1072 = vunpack.c.h.b16 %v1064
    %v1073 = vunpack.c.l.b16 %v1065
    %v1074 = vunpack.c.h.b16 %v1065
    %v1075 = vpack.c.b16 %v1069, %v1069
    %v1076 = vpack.c.b16 %v1070, %v1070
    %v1077 = vpack.c.b16 %v1071, %v1071
    %v1078 = vpack.c.b16 %v1072, %v1072
    %v1079 = vpack.c.b16 %v1073, %v1073
    %v1080 = vpack.c.b16 %v1074, %v1074
    %1087 = vst [vmem:[#allocation3 + $0x120] sm:$0xf] %v1075
    %1088 = vst [vmem:[#allocation3 + $0x124] sm:$0xf] %v1076
    %1089 = vst [vmem:[#allocation3 + $0x128] sm:$0xf] %v1077
    %1090 = vst [vmem:[#allocation3 + $0x12c] sm:$0xf] %v1078
    %1091 = vst [vmem:[#allocation3 + $0x130] sm:$0xf] %v1079
    %1092 = vst [vmem:[#allocation3 + $0x134] sm:$0xf] %v1080
    %1093 = vrot.lane.b32.xlu0 %v397, 126
    %v1094 = vpop.permute.xlu0 %1093
    %1095 = vrot.lane.b32.xlu0 %v398, 126
    %v1096 = vpop.permute.xlu0 %1095
    %1097 = vrot.lane.b32.xlu0 %v399, 126
    %v1098 = vpop.permute.xlu0 %1097
    %1099 = vrot.lane.b32.xlu0 %v400, 126
    %v1100 = vpop.permute.xlu0 %1099
    %1101 = vrot.lane.b32.xlu0 %v401, 126
    %v1102 = vpop.permute.xlu0 %1101
    %1103 = vrot.lane.b32.xlu0 %v402, 126
    %v1104 = vpop.permute.xlu0 %1103
    %v1105 = vld [vmem:[%s223] sm:$0x1]
    %v1107 = vlaneseq
    %v1108 = vshrl.u32 %v1107, 7
    %v1109 = vsub.s32 0, %v1108
    %v1110 = vrot.slane %v1105, %v1109
    %v1112 = vmul.f32 %v1094, %v1110
    %v1113 = vmul.f32 %v1096, %v1110
    %v1114 = vmul.f32 %v1098, %v1110
    %v1115 = vmul.f32 %v1100, %v1110
    %v1116 = vmul.f32 %v1102, %v1110
    %v1117 = vmul.f32 %v1104, %v1110
    %v1118 = vpack.c.bf16 %v1113, %v1112
    %v1119 = vpack.c.bf16 %v1115, %v1114
    %v1120 = vpack.c.bf16 %v1117, %v1116
    %v1124 = vunpack.c.l.b16 %v1118
    %v1125 = vunpack.c.h.b16 %v1118
    %v1126 = vunpack.c.l.b16 %v1119
    %v1127 = vunpack.c.h.b16 %v1119
    %v1128 = vunpack.c.l.b16 %v1120
    %v1129 = vunpack.c.h.b16 %v1120
    %v1130 = vpack.c.b16 %v1124, %v1124
    %v1131 = vpack.c.b16 %v1125, %v1125
    %v1132 = vpack.c.b16 %v1126, %v1126
    %v1133 = vpack.c.b16 %v1127, %v1127
    %v1134 = vpack.c.b16 %v1128, %v1128
    %v1135 = vpack.c.b16 %v1129, %v1129
    %1142 = vst [vmem:[#allocation3 + $0x138] sm:$0xf] %v1130
    %1143 = vst [vmem:[#allocation3 + $0x13c] sm:$0xf] %v1131
    %1144 = vst [vmem:[#allocation3 + $0x140] sm:$0xf] %v1132
    %1145 = vst [vmem:[#allocation3 + $0x144] sm:$0xf] %v1133
    %1146 = vst [vmem:[#allocation3 + $0x148] sm:$0xf] %v1134
    %1147 = vst [vmem:[#allocation3 + $0x14c] sm:$0xf] %v1135
    %1148 = vrot.lane.b32.xlu0 %v397, 114
    %v1149 = vpop.permute.xlu0 %1148
    %1150 = vrot.lane.b32.xlu0 %v398, 114
    %v1151 = vpop.permute.xlu0 %1150
    %1152 = vrot.lane.b32.xlu0 %v399, 114
    %v1153 = vpop.permute.xlu0 %1152
    %1154 = vrot.lane.b32.xlu0 %v400, 114
    %v1155 = vpop.permute.xlu0 %1154
    %1156 = vrot.lane.b32.xlu0 %v401, 114
    %v1157 = vpop.permute.xlu0 %1156
    %1158 = vrot.lane.b32.xlu0 %v402, 114
    %v1159 = vpop.permute.xlu0 %1158
    %v1160 = vld [vmem:[%s235] sm:$0x1]
    %v1162 = vlaneseq
    %v1163 = vshrl.u32 %v1162, 7
    %v1164 = vsub.s32 0, %v1163
    %v1165 = vrot.slane %v1160, %v1164
    %v1167 = vmul.f32 %v1149, %v1165
    %v1168 = vmul.f32 %v1151, %v1165
    %v1169 = vmul.f32 %v1153, %v1165
    %v1170 = vmul.f32 %v1155, %v1165
    %v1171 = vmul.f32 %v1157, %v1165
    %v1172 = vmul.f32 %v1159, %v1165
    %v1173 = vpack.c.bf16 %v1168, %v1167
    %v1174 = vpack.c.bf16 %v1170, %v1169
    %v1175 = vpack.c.bf16 %v1172, %v1171
    %v1179 = vunpack.c.l.b16 %v1173
    %v1180 = vunpack.c.h.b16 %v1173
    %v1181 = vunpack.c.l.b16 %v1174
    %v1182 = vunpack.c.h.b16 %v1174
    %v1183 = vunpack.c.l.b16 %v1175
    %v1184 = vunpack.c.h.b16 %v1175
    %v1185 = vpack.c.b16 %v1179, %v1179
    %v1186 = vpack.c.b16 %v1180, %v1180
    %v1187 = vpack.c.b16 %v1181, %v1181
    %v1188 = vpack.c.b16 %v1182, %v1182
    %v1189 = vpack.c.b16 %v1183, %v1183
    %v1190 = vpack.c.b16 %v1184, %v1184
    %1197 = vst [vmem:[#allocation3 + $0x150] sm:$0xf] %v1185
    %1198 = vst [vmem:[#allocation3 + $0x154] sm:$0xf] %v1186
    %1199 = vst [vmem:[#allocation3 + $0x158] sm:$0xf] %v1187
    %1200 = vst [vmem:[#allocation3 + $0x15c] sm:$0xf] %v1188
    %1201 = vst [vmem:[#allocation3 + $0x160] sm:$0xf] %v1189
    %1202 = vst [vmem:[#allocation3 + $0x164] sm:$0xf] %v1190
    %1203 = vrot.lane.b32.xlu0 %v397, 112
    %v1204 = vpop.permute.xlu0 %1203
    %1205 = vrot.lane.b32.xlu0 %v398, 112
    %v1206 = vpop.permute.xlu0 %1205
    %1207 = vrot.lane.b32.xlu0 %v399, 112
    %v1208 = vpop.permute.xlu0 %1207
    %1209 = vrot.lane.b32.xlu0 %v400, 112
    %v1210 = vpop.permute.xlu0 %1209
    %1211 = vrot.lane.b32.xlu0 %v401, 112
    %v1212 = vpop.permute.xlu0 %1211
    %1213 = vrot.lane.b32.xlu0 %v402, 112
    %v1214 = vpop.permute.xlu0 %1213
    %v1215 = vld [vmem:[%s247] sm:$0x1]
    %v1217 = vlaneseq
    %v1218 = vshrl.u32 %v1217, 7
    %v1219 = vsub.s32 0, %v1218
    %v1220 = vrot.slane %v1215, %v1219
    %v1222 = vmul.f32 %v1204, %v1220
    %v1223 = vmul.f32 %v1206, %v1220
    %v1224 = vmul.f32 %v1208, %v1220
    %v1225 = vmul.f32 %v1210, %v1220
    %v1226 = vmul.f32 %v1212, %v1220
    %v1227 = vmul.f32 %v1214, %v1220
    %v1228 = vpack.c.bf16 %v1223, %v1222
    %v1229 = vpack.c.bf16 %v1225, %v1224
    %v1230 = vpack.c.bf16 %v1227, %v1226
    %v1234 = vunpack.c.l.b16 %v1228
    %v1235 = vunpack.c.h.b16 %v1228
    %v1236 = vunpack.c.l.b16 %v1229
    %v1237 = vunpack.c.h.b16 %v1229
    %v1238 = vunpack.c.l.b16 %v1230
    %v1239 = vunpack.c.h.b16 %v1230
    %v1240 = vpack.c.b16 %v1234, %v1234
    %v1241 = vpack.c.b16 %v1235, %v1235
    %v1242 = vpack.c.b16 %v1236, %v1236
    %v1243 = vpack.c.b16 %v1237, %v1237
    %v1244 = vpack.c.b16 %v1238, %v1238
    %v1245 = vpack.c.b16 %v1239, %v1239
    %1252 = vst [vmem:[#allocation3 + $0x168] sm:$0xf] %v1240
    %1253 = vst [vmem:[#allocation3 + $0x16c] sm:$0xf] %v1241
    %1254 = vst [vmem:[#allocation3 + $0x170] sm:$0xf] %v1242
    %1255 = vst [vmem:[#allocation3 + $0x174] sm:$0xf] %v1243
    %1256 = vst [vmem:[#allocation3 + $0x178] sm:$0xf] %v1244
    %1257 = vst [vmem:[#allocation3 + $0x17c] sm:$0xf] %v1245
    %1258 = vrot.lane.b32.xlu0 %v397, 110
    %v1259 = vpop.permute.xlu0 %1258
    %1260 = vrot.lane.b32.xlu0 %v398, 110
    %v1261 = vpop.permute.xlu0 %1260
    %1262 = vrot.lane.b32.xlu0 %v399, 110
    %v1263 = vpop.permute.xlu0 %1262
    %1264 = vrot.lane.b32.xlu0 %v400, 110
    %v1265 = vpop.permute.xlu0 %1264
    %1266 = vrot.lane.b32.xlu0 %v401, 110
    %v1267 = vpop.permute.xlu0 %1266
    %1268 = vrot.lane.b32.xlu0 %v402, 110
    %v1269 = vpop.permute.xlu0 %1268
    %v1270 = vld [vmem:[%s259] sm:$0x1]
    %v1272 = vlaneseq
    %v1273 = vshrl.u32 %v1272, 7
    %v1274 = vsub.s32 0, %v1273
    %v1275 = vrot.slane %v1270, %v1274
    %v1277 = vmul.f32 %v1259, %v1275
    %v1278 = vmul.f32 %v1261, %v1275
    %v1279 = vmul.f32 %v1263, %v1275
    %v1280 = vmul.f32 %v1265, %v1275
    %v1281 = vmul.f32 %v1267, %v1275
    %v1282 = vmul.f32 %v1269, %v1275
    %v1283 = vpack.c.bf16 %v1278, %v1277
    %v1284 = vpack.c.bf16 %v1280, %v1279
    %v1285 = vpack.c.bf16 %v1282, %v1281
    %v1289 = vunpack.c.l.b16 %v1283
    %v1290 = vunpack.c.h.b16 %v1283
    %v1291 = vunpack.c.l.b16 %v1284
    %v1292 = vunpack.c.h.b16 %v1284
    %v1293 = vunpack.c.l.b16 %v1285
    %v1294 = vunpack.c.h.b16 %v1285
    %v1295 = vpack.c.b16 %v1289, %v1289
    %v1296 = vpack.c.b16 %v1290, %v1290
    %v1297 = vpack.c.b16 %v1291, %v1291
    %v1298 = vpack.c.b16 %v1292, %v1292
    %v1299 = vpack.c.b16 %v1293, %v1293
    %v1300 = vpack.c.b16 %v1294, %v1294
    %1307 = vst [vmem:[#allocation3 + $0x180] sm:$0xf] %v1295
    %1308 = vst [vmem:[#allocation3 + $0x184] sm:$0xf] %v1296
    %1309 = vst [vmem:[#allocation3 + $0x188] sm:$0xf] %v1297
    %1310 = vst [vmem:[#allocation3 + $0x18c] sm:$0xf] %v1298
    %1311 = vst [vmem:[#allocation3 + $0x190] sm:$0xf] %v1299
    %1312 = vst [vmem:[#allocation3 + $0x194] sm:$0xf] %v1300
    %v1313 = vld [vmem:[#allocation10] sm:$0xff]
    %v1314 = vld [vmem:[#allocation10 + $0x8] sm:$0xff]
    %v1315 = vld [vmem:[#allocation10 + $0x10] sm:$0xff]
    %v1316 = vld [vmem:[#allocation10 + $0x18] sm:$0xf]
    %v1317 = vld [vmem:[#allocation10 + $0x1c] sm:$0xff]
    %v1318 = vld [vmem:[#allocation10 + $0x24] sm:$0xff]
    %v1319 = vld [vmem:[#allocation10 + $0x2c] sm:$0xff]
    %v1320 = vld [vmem:[#allocation10 + $0x34] sm:$0xf]
    %v1321 = vld [vmem:[#allocation10 + $0x38] sm:$0xff]
    %v1322 = vld [vmem:[#allocation10 + $0x40] sm:$0xff]
    %v1323 = vld [vmem:[#allocation10 + $0x48] sm:$0xff]
    %v1324 = vld [vmem:[#allocation10 + $0x50] sm:$0xf]
    %v1325 = vld [vmem:[#allocation10 + $0x54] sm:$0xff]
    %v1326 = vld [vmem:[#allocation10 + $0x5c] sm:$0xff]
    %v1327 = vld [vmem:[#allocation10 + $0x64] sm:$0xff]
    %v1328 = vld [vmem:[#allocation10 + $0x6c] sm:$0xf]
    %v1329 = vld [vmem:[#allocation10 + $0x70] sm:$0xff]
    %v1330 = vld [vmem:[#allocation10 + $0x78] sm:$0xff]
    %v1331 = vld [vmem:[#allocation10 + $0x80] sm:$0xff]
    %v1332 = vld [vmem:[#allocation10 + $0x88] sm:$0xf]
    %v1333 = vld [vmem:[#allocation10 + $0x8c] sm:$0x11]
    %v1334 = vld [vmem:[#allocation10 + $0x94] sm:$0x11]
    %v1335 = vld [vmem:[#allocation10 + $0x9c] sm:$0x11]
    %v1336 = vld [vmem:[#allocation10 + $0xa4] sm:$0x1]
    %v1337 = vld [vmem:[#allocation3] sm:$0xf]
    %v1338 = vld [vmem:[#allocation3 + $0x4] sm:$0xf]
    %v1339 = vld [vmem:[#allocation3 + $0x8] sm:$0xf]
    %v1340 = vld [vmem:[#allocation3 + $0xc] sm:$0xf]
    %v1341 = vld [vmem:[#allocation3 + $0x10] sm:$0xf]
    %v1342 = vld [vmem:[#allocation3 + $0x14] sm:$0xf]
    %v1343 = vld [vmem:[#allocation3 + $0x18] sm:$0xf]
    %v1344 = vld [vmem:[#allocation3 + $0x1c] sm:$0xf]
    %v1345 = vld [vmem:[#allocation3 + $0x20] sm:$0xf]
    %v1346 = vld [vmem:[#allocation3 + $0x24] sm:$0xf]
    %v1347 = vld [vmem:[#allocation3 + $0x28] sm:$0xf]
    %v1348 = vld [vmem:[#allocation3 + $0x2c] sm:$0xf]
    %v1349 = vld [vmem:[#allocation3 + $0x30] sm:$0xf]
    %v1350 = vld [vmem:[#allocation3 + $0x34] sm:$0xf]
    %v1351 = vld [vmem:[#allocation3 + $0x38] sm:$0xf]
    %v1352 = vld [vmem:[#allocation3 + $0x3c] sm:$0xf]
    %v1353 = vld [vmem:[#allocation3 + $0x40] sm:$0xf]
    %v1354 = vld [vmem:[#allocation3 + $0x44] sm:$0xf]
    %v1355 = vld [vmem:[#allocation3 + $0x48] sm:$0xf]
    %v1356 = vld [vmem:[#allocation3 + $0x4c] sm:$0xf]
    %v1357 = vld [vmem:[#allocation3 + $0x50] sm:$0xf]
    %v1358 = vld [vmem:[#allocation3 + $0x54] sm:$0xf]
    %v1359 = vld [vmem:[#allocation3 + $0x58] sm:$0xf]
    %v1360 = vld [vmem:[#allocation3 + $0x5c] sm:$0xf]
    %v1361 = vld [vmem:[#allocation3 + $0x60] sm:$0xf]
    %v1362 = vld [vmem:[#allocation3 + $0x64] sm:$0xf]
    %v1363 = vld [vmem:[#allocation3 + $0x68] sm:$0xf]
    %v1364 = vld [vmem:[#allocation3 + $0x6c] sm:$0xf]
    %v1365 = vld [vmem:[#allocation3 + $0x70] sm:$0xf]
    %v1366 = vld [vmem:[#allocation3 + $0x74] sm:$0xf]
    %v1367 = vld [vmem:[#allocation3 + $0x78] sm:$0xf]
    %v1368 = vld [vmem:[#allocation3 + $0x7c] sm:$0xf]
    %v1369 = vld [vmem:[#allocation3 + $0x80] sm:$0xf]
    %v1370 = vld [vmem:[#allocation3 + $0x84] sm:$0xf]
    %v1371 = vld [vmem:[#allocation3 + $0x88] sm:$0xf]
    %v1372 = vld [vmem:[#allocation3 + $0x8c] sm:$0xf]
    %v1373 = vld [vmem:[#allocation3 + $0x90] sm:$0xf]
    %v1374 = vld [vmem:[#allocation3 + $0x94] sm:$0xf]
    %v1375 = vld [vmem:[#allocation3 + $0x98] sm:$0xf]
    %v1376 = vld [vmem:[#allocation3 + $0x9c] sm:$0xf]
    %v1377 = vld [vmem:[#allocation3 + $0xa0] sm:$0xf]
    %v1378 = vld [vmem:[#allocation3 + $0xa4] sm:$0xf]
    %v1379 = vld [vmem:[#allocation3 + $0xa8] sm:$0xf]
    %v1380 = vld [vmem:[#allocation3 + $0xac] sm:$0xf]
    %v1381 = vld [vmem:[#allocation3 + $0xb0] sm:$0xf]
    %v1382 = vld [vmem:[#allocation3 + $0xb4] sm:$0xf]
    %v1383 = vld [vmem:[#allocation3 + $0xb8] sm:$0xf]
    %v1384 = vld [vmem:[#allocation3 + $0xbc] sm:$0xf]
    %v1385 = vld [vmem:[#allocation3 + $0xc0] sm:$0xf]
    %v1386 = vld [vmem:[#allocation3 + $0xc4] sm:$0xf]
    %v1387 = vld [vmem:[#allocation3 + $0xc8] sm:$0xf]
    %v1388 = vld [vmem:[#allocation3 + $0xcc] sm:$0xf]
    %v1389 = vld [vmem:[#allocation3 + $0xd0] sm:$0xf]
    %v1390 = vld [vmem:[#allocation3 + $0xd4] sm:$0xf]
    %v1391 = vld [vmem:[#allocation3 + $0xd8] sm:$0xf]
    %v1392 = vld [vmem:[#allocation3 + $0xdc] sm:$0xf]
    %v1393 = vld [vmem:[#allocation3 + $0xe0] sm:$0xf]
    %v1394 = vld [vmem:[#allocation3 + $0xe4] sm:$0xf]
    %v1395 = vld [vmem:[#allocation3 + $0xe8] sm:$0xf]
    %v1396 = vld [vmem:[#allocation3 + $0xec] sm:$0xf]
    %v1397 = vld [vmem:[#allocation3 + $0xf0] sm:$0xf]
    %v1398 = vld [vmem:[#allocation3 + $0xf4] sm:$0xf]
    %v1399 = vld [vmem:[#allocation3 + $0xf8] sm:$0xf]
    %v1400 = vld [vmem:[#allocation3 + $0xfc] sm:$0xf]
    %v1401 = vld [vmem:[#allocation3 + $0x100] sm:$0xf]
    %v1402 = vld [vmem:[#allocation3 + $0x104] sm:$0xf]
    %v1403 = vld [vmem:[#allocation3 + $0x108] sm:$0xf]
    %v1404 = vld [vmem:[#allocation3 + $0x10c] sm:$0xf]
    %v1405 = vld [vmem:[#allocation3 + $0x110] sm:$0xf]
    %v1406 = vld [vmem:[#allocation3 + $0x114] sm:$0xf]
    %v1407 = vld [vmem:[#allocation3 + $0x118] sm:$0xf]
    %v1408 = vld [vmem:[#allocation3 + $0x11c] sm:$0xf]
    %v1409 = vld [vmem:[#allocation3 + $0x120] sm:$0xf]
    %v1410 = vld [vmem:[#allocation3 + $0x124] sm:$0xf]
    %v1411 = vld [vmem:[#allocation3 + $0x128] sm:$0xf]
    %v1412 = vld [vmem:[#allocation3 + $0x12c] sm:$0xf]
    %v1413 = vld [vmem:[#allocation3 + $0x130] sm:$0xf]
    %v1414 = vld [vmem:[#allocation3 + $0x134] sm:$0xf]
    %v1415 = vld [vmem:[#allocation3 + $0x138] sm:$0xf]
    %v1416 = vld [vmem:[#allocation3 + $0x13c] sm:$0xf]
    %v1417 = vld [vmem:[#allocation3 + $0x140] sm:$0xf]
    %v1418 = vld [vmem:[#allocation3 + $0x144] sm:$0xf]
    %v1419 = vld [vmem:[#allocation3 + $0x148] sm:$0xf]
    %v1420 = vld [vmem:[#allocation3 + $0x14c] sm:$0xf]
    %v1421 = vld [vmem:[#allocation3 + $0x150] sm:$0xf]
    %v1422 = vld [vmem:[#allocation3 + $0x154] sm:$0xf]
    %v1423 = vld [vmem:[#allocation3 + $0x158] sm:$0xf]
    %v1424 = vld [vmem:[#allocation3 + $0x15c] sm:$0xf]
    %v1425 = vld [vmem:[#allocation3 + $0x160] sm:$0xf]
    %v1426 = vld [vmem:[#allocation3 + $0x164] sm:$0xf]
    %v1427 = vld [vmem:[#allocation3 + $0x168] sm:$0xf]
    %v1428 = vld [vmem:[#allocation3 + $0x16c] sm:$0xf]
    %v1429 = vld [vmem:[#allocation3 + $0x170] sm:$0xf]
    %v1430 = vld [vmem:[#allocation3 + $0x174] sm:$0xf]
    %v1431 = vld [vmem:[#allocation3 + $0x178] sm:$0xf]
    %v1432 = vld [vmem:[#allocation3 + $0x17c] sm:$0xf]
    %v1433 = vld [vmem:[#allocation3 + $0x180] sm:$0xf]
    %v1434 = vld [vmem:[#allocation3 + $0x184] sm:$0xf]
    %v1435 = vld [vmem:[#allocation3 + $0x188] sm:$0xf]
    %v1436 = vld [vmem:[#allocation3 + $0x18c] sm:$0xf]
    %v1437 = vld [vmem:[#allocation3 + $0x190] sm:$0xf]
    %v1438 = vld [vmem:[#allocation3 + $0x194] sm:$0xf]
    %v1463 = vunpack.c.l.b16 %v1313
    %v1464 = vunpack.c.h.b16 %v1313
    %v1465 = vunpack.c.l.b16 %v1314
    %v1466 = vunpack.c.h.b16 %v1314
    %v1467 = vunpack.c.l.b16 %v1315
    %v1468 = vunpack.c.h.b16 %v1315
    %v1469 = vunpack.c.l.b16 %v1316
    %v1470 = vunpack.c.l.b16 %v1317
    %v1471 = vunpack.c.h.b16 %v1317
    %v1472 = vunpack.c.l.b16 %v1318
    %v1473 = vunpack.c.h.b16 %v1318
    %v1474 = vunpack.c.l.b16 %v1319
    %v1475 = vunpack.c.h.b16 %v1319
    %v1476 = vunpack.c.l.b16 %v1320
    %v1477 = vunpack.c.l.b16 %v1321
    %v1478 = vunpack.c.h.b16 %v1321
    %v1479 = vunpack.c.l.b16 %v1322
    %v1480 = vunpack.c.h.b16 %v1322
    %v1481 = vunpack.c.l.b16 %v1323
    %v1482 = vunpack.c.h.b16 %v1323
    %v1483 = vunpack.c.l.b16 %v1324
    %v1484 = vunpack.c.l.b16 %v1325
    %v1485 = vunpack.c.h.b16 %v1325
    %v1486 = vunpack.c.l.b16 %v1326
    %v1487 = vunpack.c.h.b16 %v1326
    %v1488 = vunpack.c.l.b16 %v1327
    %v1489 = vunpack.c.h.b16 %v1327
    %v1490 = vunpack.c.l.b16 %v1328
    %v1491 = vunpack.c.l.b16 %v1329
    %v1492 = vunpack.c.h.b16 %v1329
    %v1493 = vunpack.c.l.b16 %v1330
    %v1494 = vunpack.c.h.b16 %v1330
    %v1495 = vunpack.c.l.b16 %v1331
    %v1496 = vunpack.c.h.b16 %v1331
    %v1497 = vunpack.c.l.b16 %v1332
    %v1498 = vunpack.c.l.b16 %v1333
    %v1499 = vunpack.c.h.b16 %v1333
    %v1500 = vunpack.c.l.b16 %v1334
    %v1501 = vunpack.c.h.b16 %v1334
    %v1502 = vunpack.c.l.b16 %v1335
    %v1503 = vunpack.c.h.b16 %v1335
    %v1504 = vunpack.c.l.b16 %v1336
    %v1505 = vpack.c.b16 %v1470, %v1463
    %v1506 = vpack.c.b16 %v1471, %v1464
    %v1507 = vpack.c.b16 %v1472, %v1465
    %v1508 = vpack.c.b16 %v1473, %v1466
    %v1509 = vpack.c.b16 %v1474, %v1467
    %v1510 = vpack.c.b16 %v1475, %v1468
    %v1511 = vpack.c.b16 %v1476, %v1469
    %v1512 = vpack.c.b16 %v1484, %v1477
    %v1513 = vpack.c.b16 %v1485, %v1478
    %v1514 = vpack.c.b16 %v1486, %v1479
    %v1515 = vpack.c.b16 %v1487, %v1480
    %v1516 = vpack.c.b16 %v1488, %v1481
    %v1517 = vpack.c.b16 %v1489, %v1482
    %v1518 = vpack.c.b16 %v1490, %v1483
    %v1519 = vpack.c.b16 %v1498, %v1491
    %v1520 = vpack.c.b16 %v1499, %v1492
    %v1521 = vpack.c.b16 %v1500, %v1493
    %v1522 = vpack.c.b16 %v1501, %v1494
    %v1523 = vpack.c.b16 %v1502, %v1495
    %v1524 = vpack.c.b16 %v1503, %v1496
    %v1525 = vpack.c.b16 %v1504, %v1497
    %v1646 = vunpack.c.l.b16 %v1337
    %v1647 = vunpack.c.l.b16 %v1338
    %v1648 = vunpack.c.l.b16 %v1339
    %v1649 = vunpack.c.l.b16 %v1340
    %v1650 = vunpack.c.l.b16 %v1341
    %v1651 = vunpack.c.l.b16 %v1342
    %v1652 = vunpack.c.l.b16 %v1343
    %v1653 = vunpack.c.l.b16 %v1344
    %v1654 = vunpack.c.l.b16 %v1345
    %v1655 = vunpack.c.l.b16 %v1346
    %v1656 = vunpack.c.l.b16 %v1347
    %v1657 = vunpack.c.l.b16 %v1348
    %v1658 = vunpack.c.l.b16 %v1349
    %v1659 = vunpack.c.l.b16 %v1350
    %v1660 = vunpack.c.l.b16 %v1351
    %v1661 = vunpack.c.l.b16 %v1352
    %v1662 = vunpack.c.l.b16 %v1353
    %v1663 = vunpack.c.l.b16 %v1354
    %v1664 = vunpack.c.l.b16 %v1355
    %v1665 = vunpack.c.l.b16 %v1356
    %v1666 = vunpack.c.l.b16 %v1357
    %v1667 = vunpack.c.l.b16 %v1358
    %v1668 = vunpack.c.l.b16 %v1359
    %v1669 = vunpack.c.l.b16 %v1360
    %v1670 = vunpack.c.l.b16 %v1361
    %v1671 = vunpack.c.l.b16 %v1362
    %v1672 = vunpack.c.l.b16 %v1363
    %v1673 = vunpack.c.l.b16 %v1364
    %v1674 = vunpack.c.l.b16 %v1365
    %v1675 = vunpack.c.l.b16 %v1366
    %v1676 = vunpack.c.l.b16 %v1367
    %v1677 = vunpack.c.l.b16 %v1368
    %v1678 = vunpack.c.l.b16 %v1369
    %v1679 = vunpack.c.l.b16 %v1370
    %v1680 = vunpack.c.l.b16 %v1371
    %v1681 = vunpack.c.l.b16 %v1372
    %v1682 = vunpack.c.l.b16 %v1373
    %v1683 = vunpack.c.l.b16 %v1374
    %v1684 = vunpack.c.l.b16 %v1375
    %v1685 = vunpack.c.l.b16 %v1376
    %v1686 = vunpack.c.l.b16 %v1377
    %v1687 = vunpack.c.l.b16 %v1378
    %v1688 = vunpack.c.l.b16 %v1379
    %v1689 = vunpack.c.l.b16 %v1380
    %v1690 = vunpack.c.l.b16 %v1381
    %v1691 = vunpack.c.l.b16 %v1382
    %v1692 = vunpack.c.l.b16 %v1383
    %v1693 = vunpack.c.l.b16 %v1384
    %v1694 = vunpack.c.l.b16 %v1385
    %v1695 = vunpack.c.l.b16 %v1386
    %v1696 = vunpack.c.l.b16 %v1387
    %v1697 = vunpack.c.l.b16 %v1388
    %v1698 = vunpack.c.l.b16 %v1389
    %v1699 = vunpack.c.l.b16 %v1390
    %v1700 = vunpack.c.l.b16 %v1391
    %v1701 = vunpack.c.l.b16 %v1392
    %v1702 = vunpack.c.l.b16 %v1393
    %v1703 = vunpack.c.l.b16 %v1394
    %v1704 = vunpack.c.l.b16 %v1395
    %v1705 = vunpack.c.l.b16 %v1396
    %v1706 = vunpack.c.l.b16 %v1397
    %v1707 = vunpack.c.l.b16 %v1398
    %v1708 = vunpack.c.l.b16 %v1399
    %v1709 = vunpack.c.l.b16 %v1400
    %v1710 = vunpack.c.l.b16 %v1401
    %v1711 = vunpack.c.l.b16 %v1402
    %v1712 = vunpack.c.l.b16 %v1403
    %v1713 = vunpack.c.l.b16 %v1404
    %v1714 = vunpack.c.l.b16 %v1405
    %v1715 = vunpack.c.l.b16 %v1406
    %v1716 = vunpack.c.l.b16 %v1407
    %v1717 = vunpack.c.l.b16 %v1408
    %v1718 = vunpack.c.l.b16 %v1409
    %v1719 = vunpack.c.l.b16 %v1410
    %v1720 = vunpack.c.l.b16 %v1411
    %v1721 = vunpack.c.l.b16 %v1412
    %v1722 = vunpack.c.l.b16 %v1413
    %v1723 = vunpack.c.l.b16 %v1414
    %v1724 = vunpack.c.l.b16 %v1415
    %v1725 = vunpack.c.l.b16 %v1416
    %v1726 = vunpack.c.l.b16 %v1417
    %v1727 = vunpack.c.l.b16 %v1418
    %v1728 = vunpack.c.l.b16 %v1419
    %v1729 = vunpack.c.l.b16 %v1420
    %v1730 = vunpack.c.l.b16 %v1421
    %v1731 = vunpack.c.l.b16 %v1422
    %v1732 = vunpack.c.l.b16 %v1423
    %v1733 = vunpack.c.l.b16 %v1424
    %v1734 = vunpack.c.l.b16 %v1425
    %v1735 = vunpack.c.l.b16 %v1426
    %v1736 = vunpack.c.l.b16 %v1427
    %v1737 = vunpack.c.l.b16 %v1428
    %v1738 = vunpack.c.l.b16 %v1429
    %v1739 = vunpack.c.l.b16 %v1430
    %v1740 = vunpack.c.l.b16 %v1431
    %v1741 = vunpack.c.l.b16 %v1432
    %v1742 = vunpack.c.l.b16 %v1433
    %v1743 = vunpack.c.l.b16 %v1434
    %v1744 = vunpack.c.l.b16 %v1435
    %v1745 = vunpack.c.l.b16 %v1436
    %v1746 = vunpack.c.l.b16 %v1437
    %v1747 = vunpack.c.l.b16 %v1438
    %v1748 = vpack.c.b16 %v1647, %v1646
    %v1749 = vpack.c.b16 %v1649, %v1648
    %v1750 = vpack.c.b16 %v1651, %v1650
    %v1751 = vpack.c.b16 %v1653, %v1652
    %v1752 = vpack.c.b16 %v1655, %v1654
    %v1753 = vpack.c.b16 %v1657, %v1656
    %v1754 = vpack.c.b16 %v1659, %v1658
    %v1755 = vpack.c.b16 %v1661, %v1660
    %v1756 = vpack.c.b16 %v1663, %v1662
    %v1757 = vpack.c.b16 %v1665, %v1664
    %v1758 = vpack.c.b16 %v1667, %v1666
    %v1759 = vpack.c.b16 %v1669, %v1668
    %v1760 = vpack.c.b16 %v1671, %v1670
    %v1761 = vpack.c.b16 %v1673, %v1672
    %v1762 = vpack.c.b16 %v1675, %v1674
    %v1763 = vpack.c.b16 %v1677, %v1676
    %v1764 = vpack.c.b16 %v1679, %v1678
    %v1765 = vpack.c.b16 %v1681, %v1680
    %v1766 = vpack.c.b16 %v1683, %v1682
    %v1767 = vpack.c.b16 %v1685, %v1684
    %v1768 = vpack.c.b16 %v1687, %v1686
    %v1769 = vpack.c.b16 %v1689, %v1688
    %v1770 = vpack.c.b16 %v1691, %v1690
    %v1771 = vpack.c.b16 %v1693, %v1692
    %v1772 = vpack.c.b16 %v1695, %v1694
    %v1773 = vpack.c.b16 %v1697, %v1696
    %v1774 = vpack.c.b16 %v1699, %v1698
    %v1775 = vpack.c.b16 %v1701, %v1700
    %v1776 = vpack.c.b16 %v1703, %v1702
    %v1777 = vpack.c.b16 %v1705, %v1704
    %v1778 = vpack.c.b16 %v1707, %v1706
    %v1779 = vpack.c.b16 %v1709, %v1708
    %v1780 = vpack.c.b16 %v1711, %v1710
    %v1781 = vpack.c.b16 %v1713, %v1712
    %v1782 = vpack.c.b16 %v1715, %v1714
    %v1783 = vpack.c.b16 %v1717, %v1716
    %v1784 = vpack.c.b16 %v1719, %v1718
    %v1785 = vpack.c.b16 %v1721, %v1720
    %v1786 = vpack.c.b16 %v1723, %v1722
    %v1787 = vpack.c.b16 %v1725, %v1724
    %v1788 = vpack.c.b16 %v1727, %v1726
    %v1789 = vpack.c.b16 %v1729, %v1728
    %v1790 = vpack.c.b16 %v1731, %v1730
    %v1791 = vpack.c.b16 %v1733, %v1732
    %v1792 = vpack.c.b16 %v1735, %v1734
    %v1793 = vpack.c.b16 %v1737, %v1736
    %v1794 = vpack.c.b16 %v1739, %v1738
    %v1795 = vpack.c.b16 %v1741, %v1740
    %v1796 = vpack.c.b16 %v1743, %v1742
    %v1797 = vpack.c.b16 %v1745, %v1744
    %v1798 = vpack.c.b16 %v1747, %v1746
    %vm1850 = vcmask 392192
    %v1852 = vsel %vm1850, %v1511, 0
    %v1855 = vsel %vm1850, %v1518, 0
    %v1858 = vsel %vm1850, %v1525, 0
    %1860 = vmatprep.subr.bf16.mxu0 0
    %1861 = vmatpush1.bf16.msra.mxu0 %v1755
    %1862 = vmatprep.subr.bf16.mxu0 0
    %1863 = vmatpush1.bf16.msra.mxu0 %v1754
    %1864 = vmatprep.subr.bf16.mxu0 0
    %1865 = vmatpush1.bf16.msra.mxu0 %v1753
    %1866 = vmatprep.subr.bf16.mxu0 0
    %1867 = vmatpush1.bf16.msra.mxu0 %v1752
    %1868 = vmatprep.subr.bf16.mxu0 0
    %1869 = vmatpush1.bf16.msra.mxu0 %v1751
    %1870 = vmatprep.subr.bf16.mxu0 0
    %1871 = vmatpush1.bf16.msra.mxu0 %v1750
    %1872 = vmatprep.subr.bf16.mxu0 0
    %1873 = vmatpush1.bf16.msra.mxu0 %v1749
    %1874 = vmatprep.subr.bf16.mxu0 0
    %1875 = vmatpush1.bf16.msra.mxu0 %v1748
    %1876 = vmatprep.subr.bf16.mxu0 0
    %1877 = vmatpush2.bf16.msra.mxu0 %v1763
    %1878 = vmatprep.subr.bf16.mxu0 0
    %1879 = vmatpush2.bf16.msra.mxu0 %v1762
    %1880 = vmatprep.subr.bf16.mxu0 0
    %1881 = vmatpush2.bf16.msra.mxu0 %v1761
    %1882 = vmatprep.subr.bf16.mxu0 0
    %1883 = vmatpush2.bf16.msra.mxu0 %v1760
    %1884 = vmatprep.subr.bf16.mxu0 0
    %1885 = vmatpush2.bf16.msra.mxu0 %v1759
    %1886 = vmatprep.subr.bf16.mxu0 0
    %1887 = vmatpush2.bf16.msra.mxu0 %v1758
    %1888 = vmatprep.subr.bf16.mxu0 0
    %1889 = vmatpush2.bf16.msra.mxu0 %v1757
    %1890 = vmatprep.subr.bf16.mxu0 0
    %1891 = vmatpush2.bf16.msra.mxu0 %v1756
    %1892 = vmatprep.mubr.bf16.mxu0 %v1506
    %1893 = vmatmul.mubr.bf16.gmra.mxu0 %v1505
    %v1894 = vpop.f32.mrf.mxu0
    %v1895 = vadd.f32 0.0, %v1894
    %v1896 = vpop.f32.mrf.mxu0
    %v1897 = vpop.f32.mrf.mxu0
    %v1898 = vadd.f32 0.0, %v1897
    %v1899 = vpop.f32.mrf.mxu0
    %1900 = vmatprep.mubr.bf16.mxu0 %v1513
    %1901 = vmatmul.mubr.bf16.gmra.mxu0 %v1512
    %v1902 = vpop.f32.mrf.mxu0
    %v1903 = vadd.f32 0.0, %v1902
    %v1904 = vpop.f32.mrf.mxu0
    %v1905 = vpop.f32.mrf.mxu0
    %v1906 = vadd.f32 0.0, %v1905
    %v1907 = vpop.f32.mrf.mxu0
    %1908 = vmatprep.mubr.bf16.mxu0 %v1520
    %1909 = vmatmul.mubr.bf16.gmra.mxu0 %v1519
    %v1910 = vpop.f32.mrf.mxu0
    %v1911 = vadd.f32 0.0, %v1910
    %v1912 = vpop.f32.mrf.mxu0
    %v1913 = vpop.f32.mrf.mxu0
    %v1914 = vadd.f32 0.0, %v1913
    %v1915 = vpop.f32.mrf.mxu0
    %1916 = vdwg.mxu0
    %1917 = vmatprep.subr.bf16.mxu0 0
    %1918 = vmatpush1.bf16.msra.mxu0 %v1771
    %1919 = vmatprep.subr.bf16.mxu0 0
    %1920 = vmatpush1.bf16.msra.mxu0 %v1770
    %1921 = vmatprep.subr.bf16.mxu0 0
    %1922 = vmatpush1.bf16.msra.mxu0 %v1769
    %1923 = vmatprep.subr.bf16.mxu0 0
    %1924 = vmatpush1.bf16.msra.mxu0 %v1768
    %1925 = vmatprep.subr.bf16.mxu0 0
    %1926 = vmatpush1.bf16.msra.mxu0 %v1767
    %1927 = vmatprep.subr.bf16.mxu0 0
    %1928 = vmatpush1.bf16.msra.mxu0 %v1766
    %1929 = vmatprep.subr.bf16.mxu0 0
    %1930 = vmatpush1.bf16.msra.mxu0 %v1765
    %1931 = vmatprep.subr.bf16.mxu0 0
    %1932 = vmatpush1.bf16.msra.mxu0 %v1764
    %1933 = vmatprep.subr.bf16.mxu0 0
    %1934 = vmatpush2.bf16.msra.mxu0 %v1779
    %1935 = vmatprep.subr.bf16.mxu0 0
    %1936 = vmatpush2.bf16.msra.mxu0 %v1778
    %1937 = vmatprep.subr.bf16.mxu0 0
    %1938 = vmatpush2.bf16.msra.mxu0 %v1777
    %1939 = vmatprep.subr.bf16.mxu0 0
    %1940 = vmatpush2.bf16.msra.mxu0 %v1776
    %1941 = vmatprep.subr.bf16.mxu0 0
    %1942 = vmatpush2.bf16.msra.mxu0 %v1775
    %1943 = vmatprep.subr.bf16.mxu0 0
    %1944 = vmatpush2.bf16.msra.mxu0 %v1774
    %1945 = vmatprep.subr.bf16.mxu0 0
    %1946 = vmatpush2.bf16.msra.mxu0 %v1773
    %1947 = vmatprep.subr.bf16.mxu0 0
    %1948 = vmatpush2.bf16.msra.mxu0 %v1772
    %1949 = vmatprep.mubr.bf16.mxu0 %v1508
    %1950 = vmatmul.mubr.bf16.gmra.mxu0 %v1507
    %v1951 = vpop.f32.mrf.mxu0
    %v1952 = vadd.f32 %v1895, %v1951
    %v1953 = vpop.f32.mrf.mxu0
    %v1954 = vpop.f32.mrf.mxu0
    %v1955 = vadd.f32 %v1898, %v1954
    %v1956 = vpop.f32.mrf.mxu0
    %1957 = vmatprep.mubr.bf16.mxu0 %v1515
    %1958 = vmatmul.mubr.bf16.gmra.mxu0 %v1514
    %v1959 = vpop.f32.mrf.mxu0
    %v1960 = vadd.f32 %v1903, %v1959
    %v1961 = vpop.f32.mrf.mxu0
    %v1962 = vpop.f32.mrf.mxu0
    %v1963 = vadd.f32 %v1906, %v1962
    %v1964 = vpop.f32.mrf.mxu0
    %1965 = vmatprep.mubr.bf16.mxu0 %v1522
    %1966 = vmatmul.mubr.bf16.gmra.mxu0 %v1521
    %v1967 = vpop.f32.mrf.mxu0
    %v1968 = vadd.f32 %v1911, %v1967
    %v1969 = vpop.f32.mrf.mxu0
    %v1970 = vpop.f32.mrf.mxu0
    %v1971 = vadd.f32 %v1914, %v1970
    %v1972 = vpop.f32.mrf.mxu0
    %1973 = vdwg.mxu0
    %1974 = vmatprep.subr.bf16.mxu0 0
    %1975 = vmatpush1.bf16.msra.mxu0 %v1787
    %1976 = vmatprep.subr.bf16.mxu0 0
    %1977 = vmatpush1.bf16.msra.mxu0 %v1786
    %1978 = vmatprep.subr.bf16.mxu0 0
    %1979 = vmatpush1.bf16.msra.mxu0 %v1785
    %1980 = vmatprep.subr.bf16.mxu0 0
    %1981 = vmatpush1.bf16.msra.mxu0 %v1784
    %1982 = vmatprep.subr.bf16.mxu0 0
    %1983 = vmatpush1.bf16.msra.mxu0 %v1783
    %1984 = vmatprep.subr.bf16.mxu0 0
    %1985 = vmatpush1.bf16.msra.mxu0 %v1782
    %1986 = vmatprep.subr.bf16.mxu0 0
    %1987 = vmatpush1.bf16.msra.mxu0 %v1781
    %1988 = vmatprep.subr.bf16.mxu0 0
    %1989 = vmatpush1.bf16.msra.mxu0 %v1780
    %1990 = vmatprep.subr.bf16.mxu0 0
    %1991 = vmatpush2.bf16.msra.mxu0 %v1795
    %1992 = vmatprep.subr.bf16.mxu0 0
    %1993 = vmatpush2.bf16.msra.mxu0 %v1794
    %1994 = vmatprep.subr.bf16.mxu0 0
    %1995 = vmatpush2.bf16.msra.mxu0 %v1793
    %1996 = vmatprep.subr.bf16.mxu0 0
    %1997 = vmatpush2.bf16.msra.mxu0 %v1792
    %1998 = vmatprep.subr.bf16.mxu0 0
    %1999 = vmatpush2.bf16.msra.mxu0 %v1791
    %2000 = vmatprep.subr.bf16.mxu0 0
    %2001 = vmatpush2.bf16.msra.mxu0 %v1790
    %2002 = vmatprep.subr.bf16.mxu0 0
    %2003 = vmatpush2.bf16.msra.mxu0 %v1789
    %2004 = vmatprep.subr.bf16.mxu0 0
    %2005 = vmatpush2.bf16.msra.mxu0 %v1788
    %2006 = vmatprep.mubr.bf16.mxu0 %v1510
    %2007 = vmatmul.mubr.bf16.gmra.mxu0 %v1509
    %v2008 = vpop.f32.mrf.mxu0
    %v2009 = vadd.f32 %v1952, %v2008
    %v2010 = vpop.f32.mrf.mxu0
    %v2011 = vpop.f32.mrf.mxu0
    %v2012 = vadd.f32 %v1955, %v2011
    %v2013 = vpop.f32.mrf.mxu0
    %2014 = vmatprep.mubr.bf16.mxu0 %v1517
    %2015 = vmatmul.mubr.bf16.gmra.mxu0 %v1516
    %v2016 = vpop.f32.mrf.mxu0
    %v2017 = vadd.f32 %v1960, %v2016
    %v2018 = vpop.f32.mrf.mxu0
    %v2019 = vpop.f32.mrf.mxu0
    %v2020 = vadd.f32 %v1963, %v2019
    %v2021 = vpop.f32.mrf.mxu0
    %2022 = vmatprep.mubr.bf16.mxu0 %v1524
    %2023 = vmatmul.mubr.bf16.gmra.mxu0 %v1523
    %v2024 = vpop.f32.mrf.mxu0
    %v2025 = vadd.f32 %v1968, %v2024
    %v2026 = vpop.f32.mrf.mxu0
    %v2027 = vpop.f32.mrf.mxu0
    %v2028 = vadd.f32 %v1971, %v2027
    %v2029 = vpop.f32.mrf.mxu0
    %2030 = vdwg.mxu0
    %2031 = vmatprep.subr.bf16.mxu0 0
    %2032 = vmatpush1.bf16.msra.mxu0 0
    %2033 = vmatprep.subr.bf16.mxu0 0
    %2034 = vmatpush1.bf16.msra.mxu0 0
    %2035 = vmatprep.subr.bf16.mxu0 0
    %2036 = vmatpush1.bf16.msra.mxu0 0
    %2037 = vmatprep.subr.bf16.mxu0 0
    %2038 = vmatpush1.bf16.msra.mxu0 0
    %2039 = vmatprep.subr.bf16.mxu0 0
    %2040 = vmatpush1.bf16.msra.mxu0 0
    %2041 = vmatprep.subr.bf16.mxu0 0
    %2042 = vmatpush1.bf16.msra.mxu0 %v1798
    %2043 = vmatprep.subr.bf16.mxu0 0
    %2044 = vmatpush1.bf16.msra.mxu0 %v1797
    %2045 = vmatprep.subr.bf16.mxu0 0
    %2046 = vmatpush1.bf16.msra.mxu0 %v1796
    %2047 = vmatprep.subr.bf16.mxu0 0
    %2048 = vmatpush2.bf16.msra.mxu0 0
    %2049 = vmatprep.subr.bf16.mxu0 0
    %2050 = vmatpush2.bf16.msra.mxu0 0
    %2051 = vmatprep.subr.bf16.mxu0 0
    %2052 = vmatpush2.bf16.msra.mxu0 0
    %2053 = vmatprep.subr.bf16.mxu0 0
    %2054 = vmatpush2.bf16.msra.mxu0 0
    %2055 = vmatprep.subr.bf16.mxu0 0
    %2056 = vmatpush2.bf16.msra.mxu0 0
    %2057 = vmatprep.subr.bf16.mxu0 0
    %2058 = vmatpush2.bf16.msra.mxu0 0
    %2059 = vmatprep.subr.bf16.mxu0 0
    %2060 = vmatpush2.bf16.msra.mxu0 0
    %2061 = vmatprep.subr.bf16.mxu0 0
    %2062 = vmatpush2.bf16.msra.mxu0 0
    %2063 = vmatprep.mubr.bf16.mxu0 0
    %2064 = vmatmul.mubr.bf16.gmra.mxu0 %v1852
    %v2065 = vpop.f32.mrf.mxu0
    %v2066 = vadd.f32 %v2009, %v2065
    %v2067 = vpop.f32.mrf.mxu0
    %v2068 = vpop.f32.mrf.mxu0
    %v2069 = vadd.f32 %v2012, %v2068
    %v2070 = vpop.f32.mrf.mxu0
    %2071 = vmatprep.mubr.bf16.mxu0 0
    %2072 = vmatmul.mubr.bf16.gmra.mxu0 %v1855
    %v2073 = vpop.f32.mrf.mxu0
    %v2074 = vadd.f32 %v2017, %v2073
    %v2075 = vpop.f32.mrf.mxu0
    %v2076 = vpop.f32.mrf.mxu0
    %v2077 = vadd.f32 %v2020, %v2076
    %v2078 = vpop.f32.mrf.mxu0
    %2079 = vmatprep.mubr.bf16.mxu0 0
    %2080 = vmatmul.mubr.bf16.gmra.mxu0 %v1858
    %v2081 = vpop.f32.mrf.mxu0
    %v2082 = vadd.f32 %v2025, %v2081
    %v2083 = vpop.f32.mrf.mxu0
    %v2084 = vpop.f32.mrf.mxu0
    %v2085 = vadd.f32 %v2028, %v2084
    %v2086 = vpop.f32.mrf.mxu0
    %2087 = vdwg.mxu0
    %v2088 = vmax.f32 %v2066, 0.0
    %v2089 = vmax.f32 %v2069, 0.0
    %v2090 = vmax.f32 %v2074, 0.0
    %v2091 = vmax.f32 %v2077, 0.0
    %v2092 = vmax.f32 %v2082, 0.0
    %v2093 = vmax.f32 %v2085, 0.0
    %v2094 = vld [vmem:[%s4] sm:$0x1]
    %v2095 = vpack.c.bf16 %v2089, %v2088
    %v2096 = vpack.c.bf16 %v2091, %v2090
    %v2097 = vpack.c.bf16 %v2093, %v2092
    %vm2098 = vcmask 334848
    %v2100 = vsel %vm2098, %v2094, 0
    %vm2102 = vcmask 1043456
    %vm2103 = vcmask 1044480
    %v2104 = vsel %vm2102, 4294967295, 65535
    %v2105 = vsel %vm2103, %v2104, 0
    %v2107 = vand.u32 %v2097, %v2105
    %2109 = vmatprep.subr.bf16.mxu0 0
    %2110 = vmatpush1.bf16.msra.mxu0 0
    %2111 = vmatprep.subr.bf16.mxu0 0
    %2112 = vmatpush1.bf16.msra.mxu0 0
    %2113 = vmatprep.subr.bf16.mxu0 0
    %2114 = vmatpush1.bf16.msra.mxu0 0
    %2115 = vmatprep.subr.bf16.mxu0 0
    %2116 = vmatpush1.bf16.msra.mxu0 0
    %2117 = vmatprep.subr.bf16.mxu0 0
    %2118 = vmatpush1.bf16.msra.mxu0 0
    %2119 = vmatprep.subr.bf16.mxu0 0
    %2120 = vmatpush1.bf16.msra.mxu0 %v2107
    %2121 = vmatprep.subr.bf16.mxu0 0
    %2122 = vmatpush1.bf16.msra.mxu0 %v2096
    %2123 = vmatprep.subr.bf16.mxu0 0
    %2124 = vmatpush1.bf16.msra.mxu0 %v2095
    %2125 = vmatprep.subr.bf16.mxu0 0
    %2126 = vmatpush2.bf16.msra.mxu0 0
    %2127 = vmatprep.subr.bf16.mxu0 0
    %2128 = vmatpush2.bf16.msra.mxu0 0
    %2129 = vmatprep.subr.bf16.mxu0 0
    %2130 = vmatpush2.bf16.msra.mxu0 0
    %2131 = vmatprep.subr.bf16.mxu0 0
    %2132 = vmatpush2.bf16.msra.mxu0 0
    %2133 = vmatprep.subr.bf16.mxu0 0
    %2134 = vmatpush2.bf16.msra.mxu0 0
    %2135 = vmatprep.subr.bf16.mxu0 0
    %2136 = vmatpush2.bf16.msra.mxu0 0
    %2137 = vmatprep.subr.bf16.mxu0 0
    %2138 = vmatpush2.bf16.msra.mxu0 0
    %2139 = vmatprep.subr.bf16.mxu0 0
    %2140 = vmatpush2.bf16.msra.mxu0 0
    %2141 = vmatprep.mubr.bf16.mxu0 0
    %2142 = vmatmul.mubr.bf16.gmra.mxu0 %v2100
    %v2143 = vpop.f32.mrf.mxu0
    %v2144 = vadd.f32 0.0, %v2143
    %v2145 = vpop.f32.mrf.mxu0
    %v2146 = vpop.f32.mrf.mxu0
    %v2147 = vpop.f32.mrf.mxu0
    %2148 = vdwg.mxu0
    %v2149 = vtanh.pop %v2144
    %2150 = vst [vmem:[#allocation12] sm:$0x1] %v2149
    // Predicated region
    $region38: #{tpu_custom_call.1} parent=1 // pred_check
      _
    $region39: #{tpu_custom_call.1} parent=1 // pred_check_branch
      %2152 = sbr.rel (0) target = $region41
    $region40: #{tpu_custom_call.1} parent=1 // pred_region
      %s2154 = ssub.s32 16, 16
      %2155 = vsyncadd [#allocation6], %s2154
      %s2157 = sshll.u32 [#allocation12], 4
      %s2158 = int_to_ptr.vmem [resolvable:$true] %s2157
      %2160 = dma.vmem_to_hbm [thread:$0]  %s2158, 16, %s5, [#allocation6]
    $region41: #{tpu_custom_call.1} parent=1 // pred_fallthru
      _
    // Predicated region
    $region42: #{tpu_custom_call.1} parent=1 // pred_check
      _
    $region43: #{tpu_custom_call.1} parent=1 // pred_check_branch
      %2162 = sbr.rel (0) target = $region45
    $region44: #{tpu_custom_call.1} parent=1 // pred_region
      %2163 = dma.done [#allocation6], 16
    $region45: #{tpu_custom_call.1} parent=1 // pred_fallthru
      _
    %2164 = vsyncpa [#allocation5], 1
    %2165 = vsyncpa [#allocation8], 1
    %2166 = vsyncpa [#allocation11], 1
    %2167 = vsyncpa [#allocation6], 1

</llo_original>
